<compile_context>
chip_gen: v5e
topology: v5e:2x2
jax: 0.10.0
libtpu: 0.0.40
codegen_flags: <defaults>
</compile_context>

<pallas_src>
import functools

import jax
import jax.numpy as jnp
from jax import lax
from jax.experimental import pallas as pl
from jax.experimental.pallas import tpu as pltpu

MAXPAD = 3          # largest conv padding (kernel_size=7 branch)
KTAPS = 7           # fused multi-scale conv tap count
BN_EPS = 1e-5
C_BRANCH = 192      # real concatenated branch channels (3 x 64)
C_PAD = 256         # lane-aligned padded width for the fused branch conv
C_FUSE = 128        # fusion channel width


def _round_up(v, m):
    return (v + m - 1) // m * m


# ----------------------------- kernel helpers ------------------------------ #
def _bn_relu(y, mask, inv_count, gamma, beta, apply_mask):
    """One-pass train-mode BatchNorm + ReLU over the valid (mask==1) rows.

    y: [N, C] f32, mask: [N, 1] f32 (exact 0/1).  Stats via masked sum /
    sum-of-squares (var = E[y^2] - mean^2, clamped at 0), then a folded
    per-channel scale/shift: h = max(y*scale + shift, 0)."""
    ym = y * mask
    s1 = jnp.sum(ym, axis=0, keepdims=True)
    s2 = jnp.sum(ym * ym, axis=0, keepdims=True)
    mean = s1 * inv_count
    var = jnp.maximum(s2 * inv_count - mean * mean, 0.0)
    scale = gamma * lax.rsqrt(var + BN_EPS)
    shift = beta - mean * scale
    h = jnp.maximum(y * scale + shift, 0.0)
    return h * mask if apply_mask else h


# --------------------------------- kernel ---------------------------------- #
def _make_kernel(B, L, Lp):
    N = B * Lp                       # stacked rows (zero border + align padding)
    inv_valid = 1.0 / float(B * L)

    def kernel(xcol_ref,
               wcomb_ref, bcomb_ref,
               wfa_ref, bfa_ref, g1_ref, be1_ref,
               wf2_ref, bf2_ref, g2_ref, be2_ref,
               wfc_ref, bfc_ref, g3_ref, be3_ref,
               out_ref):
        # Valid-row masks built in-kernel (no [N,1] DMA).  Row r is valid iff
        # 1 <= (r mod Lp) <= L; row 0 of each block and trailing rows are the
        # zero borders / alignment padding.
        row = lax.broadcasted_iota(jnp.int32, (N, 1), 0)
        rm = row % Lp
        mask = jnp.logical_and(rm >= 1, rm <= L).astype(jnp.float32)       # [N,1]
        row2 = lax.broadcasted_iota(jnp.int32, (N - 2, 1), 0) + 1          # h2 center rows
        rm2 = row2 % Lp
        mask2 = jnp.logical_and(rm2 >= 1, rm2 <= L).astype(jnp.float32)    # [N-2,1]

        # ---- stage 1: fused 3-branch conv (one im2col matmul) + ReLU ------ #
        y = jnp.dot(xcol_ref[...], wcomb_ref[...],
                    preferred_element_type=jnp.float32)                    # [N, 256]
        y = jnp.maximum(y + bcomb_ref[...], 0.0)   # per-branch ReLU == ReLU on concat

        # ---- 1x1 fusion conv + BN1 + ReLU (borders re-zeroed by mask) ------ #
        y = jnp.dot(y.astype(jnp.bfloat16), wfa_ref[...],
                    preferred_element_type=jnp.float32) + bfa_ref[...]     # [N, 128]
        h1 = _bn_relu(y, mask, inv_valid, g1_ref[...], be1_ref[...],
                      apply_mask=True)

        # ---- fusion Conv1d(128,128,k=3,pad=1): padded-stack im2col --------- #
        # Border rows of h1 are exact zeros, so the shifted static slices never
        # mix batch elements and supply the conv zero padding for free.
        h1b = h1.astype(jnp.bfloat16)
        cols2 = jnp.concatenate(
            [h1b[0:N - 2, :], h1b[1:N - 1, :], h1b[2:N, :]], axis=-1)      # [N-2, 384]
        y2 = jnp.dot(cols2, wf2_ref[...],
                     preferred_element_type=jnp.float32) + bf2_ref[...]    # [N-2, 128]
        h2 = _bn_relu(y2, mask2, inv_valid, g2_ref[...], be2_ref[...],
                      apply_mask=False)          # pooling reads valid rows only

        # ---- adaptive_max_pool1d(., 1): per-batch max over valid rows ------ #
        # Lp % 8 == 0, so every slice is sublane-aligned; pooled rows are plain
        # values feeding the final matmul (no scratch, no partial stores).
        pooled = jnp.concatenate(
            [jnp.max(h2[b * Lp:b * Lp + L, :], axis=0, keepdims=True)
             for b in range(B)], axis=0)                                   # [B, 128]

        # ---- Linear + BN3 over the batch (f32), single output store -------- #
        z = jnp.dot(pooled, wfc_ref[...],
                    preferred_element_type=jnp.float32) + bfc_ref[...]     # [B, F]
        zm = jnp.mean(z, axis=0, keepdims=True)
        zv = jnp.mean((z - zm) ** 2, axis=0, keepdims=True)
        out_ref[...] = (z - zm) * lax.rsqrt(zv + BN_EPS) * g3_ref[...] + be3_ref[...]

    return kernel


# ------------------------------ JAX wrapper -------------------------------- #
def init_params(key, in_channels=32, feature_dim=128):
    ks = jax.random.split(key, 12)

    def w(k, shape, scale=0.05):
        return scale * jax.random.normal(k, shape, jnp.float32)

    return dict(
        conv1_w=w(ks[0], (64, in_channels, 3)), conv1_b=w(ks[1], (64,)),
        conv2_w=w(ks[2], (64, in_channels, 5)), conv2_b=w(ks[3], (64,)),
        conv3_w=w(ks[4], (64, in_channels, 7)), conv3_b=w(ks[5], (64,)),
        fuse1_w=w(ks[6], (128, 192, 1)), fuse1_b=w(ks[7], (128,)),
        bn1_g=jnp.ones((128,), jnp.float32), bn1_b=jnp.zeros((128,), jnp.float32),
        fuse2_w=w(ks[8], (128, 128, 3)), fuse2_b=w(ks[9], (128,)),
        bn2_g=jnp.ones((128,), jnp.float32), bn2_b=jnp.zeros((128,), jnp.float32),
        fc_w=w(ks[10], (feature_dim, 128)), fc_b=w(ks[11], (feature_dim,)),
        bn3_g=jnp.ones((feature_dim,), jnp.float32),
        bn3_b=jnp.zeros((feature_dim,), jnp.float32),
    )


def _taps(w):          # [C_out, C_in, K] -> [K, C_in, C_out]
    return jnp.transpose(w, (2, 1, 0))


def _row(v):           # [C] -> [1, C] f32
    return v.reshape(1, -1).astype(jnp.float32)


@functools.partial(jax.jit, static_argnames=("feature_dim",))
def tcr_extractor_forward(x, params, feature_dim=128):
    B, L, C_in = x.shape
    Lp = _round_up(L + 2, 8)         # 8-aligned per-batch row block (border rows incl.)
    N = B * Lp

    # ---- layout plumbing: early-bf16 im2col + padded batch stacking (XLA) -- #
    xb = x.astype(jnp.bfloat16)
    xp = jnp.pad(xb, ((0, 0), (MAXPAD, MAXPAD), (0, 0)))                 # [B, L+6, C]
    cols = jnp.concatenate([xp[:, k:k + L, :] for k in range(KTAPS)], axis=-1)
    cols = jnp.pad(cols, ((0, 0), (1, Lp - L - 1), (0, 0)))              # zero border + align rows
    xcol = cols.reshape(N, KTAPS * C_in)                                 # [N, 7*C_in] bf16

    # Combined 7-tap branch weight [7*C_in, 256]: conv1|conv2|conv3 channels,
    # each branch's taps zero-padded out to 7 and centered (padding 1/2/3);
    # output channels zero-padded 192 -> 256 for lane alignment.
    def embed(wt, pad):              # wt: [K, C_in, 64]
        off = MAXPAD - pad
        return jnp.pad(wt, ((off, KTAPS - wt.shape[0] - off), (0, 0), (0, 0)))

    wcomb = jnp.concatenate(
        [embed(_taps(params['conv1_w']), 1),
         embed(_taps(params['conv2_w']), 2),
         embed(_taps(params['conv3_w']), 3)], axis=-1)                   # [7, C_in, 192]
    wcomb = jnp.pad(wcomb, ((0, 0), (0, 0), (0, C_PAD - C_BRANCH)))
    wcomb = wcomb.reshape(KTAPS * C_in, C_PAD).astype(jnp.bfloat16)
    bcomb = jnp.pad(
        _row(jnp.concatenate([params['conv1_b'], params['conv2_b'],
                              params['conv3_b']])),
        ((0, 0), (0, C_PAD - C_BRANCH)))                                 # [1, 256] f32

    wfa = jnp.pad(jnp.transpose(params['fuse1_w'][:, :, 0], (1, 0)),
                  ((0, C_PAD - C_BRANCH), (0, 0))).astype(jnp.bfloat16)  # [256, 128]
    wf2 = _taps(params['fuse2_w']).reshape(3 * C_FUSE, C_FUSE).astype(jnp.bfloat16)
    wfc = jnp.transpose(params['fc_w'], (1, 0))                          # [128, F] f32

    inputs = [
        xcol,
        wcomb, bcomb,
        wfa, _row(params['fuse1_b']), _row(params['bn1_g']), _row(params['bn1_b']),
        wf2, _row(params['fuse2_b']), _row(params['bn2_g']), _row(params['bn2_b']),
        wfc, _row(params['fc_b']), _row(params['bn3_g']), _row(params['bn3_b']),
    ]

    vmem_spec = pl.BlockSpec(memory_space=pltpu.MemorySpace.VMEM)
    return pl.pallas_call(
        _make_kernel(B, L, Lp),
        out_shape=jax.ShapeDtypeStruct((B, feature_dim), jnp.float32),
        in_specs=[vmem_spec] * len(inputs),
        out_specs=vmem_spec,
        compiler_params=pltpu.CompilerParams(vmem_limit_bytes=32 * 1024 * 1024),
    )(*inputs)


if __name__ == "__main__":
    key = jax.random.PRNGKey(0)
    kx, kp = jax.random.split(key)

    B, L, C_in, feature_dim = 2, 16, 32, 128      # x: [batch, seq_len, embed_dim]
    x = jax.random.normal(kx, (B, L, C_in), jnp.float32)
    params = init_params(kp, in_channels=C_in, feature_dim=feature_dim)

    out = tcr_extractor_forward(x, params, feature_dim=feature_dim)
    jax.block_until_ready(out)
    assert out.shape == (B, feature_dim) and out.dtype == jnp.float32
    assert bool(jnp.isfinite(out).all())
    print("KERNEL_OK")
</pallas_src>

<mosaic_0001>
module attributes {stable_mosaic.version = 11 : i64} {
  func.func @kernel(%arg0: memref<48x224xbf16, #tpu.memory_space<vmem>>, %arg1: memref<224x256xbf16, #tpu.memory_space<vmem>>, %arg2: memref<1x256xf32, #tpu.memory_space<vmem>>, %arg3: memref<256x128xbf16, #tpu.memory_space<vmem>>, %arg4: memref<1x128xf32, #tpu.memory_space<vmem>>, %arg5: memref<1x128xf32, #tpu.memory_space<vmem>>, %arg6: memref<1x128xf32, #tpu.memory_space<vmem>>, %arg7: memref<384x128xbf16, #tpu.memory_space<vmem>>, %arg8: memref<1x128xf32, #tpu.memory_space<vmem>>, %arg9: memref<1x128xf32, #tpu.memory_space<vmem>>, %arg10: memref<1x128xf32, #tpu.memory_space<vmem>>, %arg11: memref<128x128xf32, #tpu.memory_space<vmem>>, %arg12: memref<1x128xf32, #tpu.memory_space<vmem>>, %arg13: memref<1x128xf32, #tpu.memory_space<vmem>>, %arg14: memref<1x128xf32, #tpu.memory_space<vmem>>, %arg15: memref<2x128xf32, #tpu.memory_space<vmem>>) attributes {dimension_semantics = [], scalar_prefetch = 0 : i64, scratch_operands = 0 : i64, tpu.core_type = #tpu.core_type<tc>} {
    %0 = tpu.iota {dimensions = array<i32: 0>} : vector<48x1xi32>
    %c24_i32 = arith.constant 24 : i32
    %c0_i32 = arith.constant 0 : i32
    %1 = arith.cmpi eq, %c24_i32, %c0_i32 : i32
    %c1_i32 = arith.constant 1 : i32
    %2 = arith.select %1, %c1_i32, %c24_i32 : i32
    %3 = vector.broadcast %2 : i32 to vector<48x1xi32>
    %4 = arith.remsi %0, %3 : vector<48x1xi32>
    %c0_i32_0 = arith.constant 0 : i32
    %5 = vector.broadcast %c0_i32_0 : i32 to vector<48x1xi32>
    %6 = arith.cmpi ne, %4, %5 : vector<48x1xi32>
    %c0_i32_1 = arith.constant 0 : i32
    %7 = vector.broadcast %c0_i32_1 : i32 to vector<48x1xi32>
    %8 = arith.cmpi slt, %4, %7 : vector<48x1xi32>
    %c0_i32_2 = arith.constant 0 : i32
    %9 = arith.cmpi slt, %2, %c0_i32_2 : i32
    %10 = vector.broadcast %9 : i1 to vector<48x1xi1>
    %11 = vector.broadcast %10 : vector<48x1xi1> to vector<48x1xi1>
    %12 = arith.xori %8, %11 : vector<48x1xi1>
    %13 = arith.andi %12, %6 : vector<48x1xi1>
    %14 = vector.broadcast %2 : i32 to vector<48x1xi32>
    %15 = arith.addi %4, %14 : vector<48x1xi32>
    %16 = arith.select %13, %15, %4 : vector<48x1xi1>, vector<48x1xi32>
    %c1_i32_3 = arith.constant 1 : i32
    %17 = vector.broadcast %c1_i32_3 : i32 to vector<48x1xi32>
    %18 = arith.cmpi sge, %16, %17 : vector<48x1xi32>
    %c16_i32 = arith.constant 16 : i32
    %19 = vector.broadcast %c16_i32 : i32 to vector<48x1xi32>
    %20 = arith.cmpi sle, %16, %19 : vector<48x1xi32>
    %21 = arith.andi %18, %20 : vector<48x1xi1>
    %22 = arith.extui %21 : vector<48x1xi1> to vector<48x1xi32>
    %23 = arith.sitofp %22 : vector<48x1xi32> to vector<48x1xf32>
    %24 = tpu.iota {dimensions = array<i32: 0>} : vector<46x1xi32>
    %c1_i32_4 = arith.constant 1 : i32
    %25 = vector.broadcast %c1_i32_4 : i32 to vector<46x1xi32>
    %26 = arith.addi %24, %25 : vector<46x1xi32>
    %c24_i32_5 = arith.constant 24 : i32
    %c0_i32_6 = arith.constant 0 : i32
    %27 = arith.cmpi eq, %c24_i32_5, %c0_i32_6 : i32
    %c1_i32_7 = arith.constant 1 : i32
    %28 = arith.select %27, %c1_i32_7, %c24_i32_5 : i32
    %29 = vector.broadcast %28 : i32 to vector<46x1xi32>
    %30 = arith.remsi %26, %29 : vector<46x1xi32>
    %c0_i32_8 = arith.constant 0 : i32
    %31 = vector.broadcast %c0_i32_8 : i32 to vector<46x1xi32>
    %32 = arith.cmpi ne, %30, %31 : vector<46x1xi32>
    %c0_i32_9 = arith.constant 0 : i32
    %33 = vector.broadcast %c0_i32_9 : i32 to vector<46x1xi32>
    %34 = arith.cmpi slt, %30, %33 : vector<46x1xi32>
    %c0_i32_10 = arith.constant 0 : i32
    %35 = arith.cmpi slt, %28, %c0_i32_10 : i32
    %36 = vector.broadcast %35 : i1 to vector<46x1xi1>
    %37 = vector.broadcast %36 : vector<46x1xi1> to vector<46x1xi1>
    %38 = arith.xori %34, %37 : vector<46x1xi1>
    %39 = arith.andi %38, %32 : vector<46x1xi1>
    %40 = vector.broadcast %28 : i32 to vector<46x1xi32>
    %41 = arith.addi %30, %40 : vector<46x1xi32>
    %42 = arith.select %39, %41, %30 : vector<46x1xi1>, vector<46x1xi32>
    %c1_i32_11 = arith.constant 1 : i32
    %43 = vector.broadcast %c1_i32_11 : i32 to vector<46x1xi32>
    %44 = arith.cmpi sge, %42, %43 : vector<46x1xi32>
    %c16_i32_12 = arith.constant 16 : i32
    %45 = vector.broadcast %c16_i32_12 : i32 to vector<46x1xi32>
    %46 = arith.cmpi sle, %42, %45 : vector<46x1xi32>
    %47 = arith.andi %44, %46 : vector<46x1xi1>
    %48 = arith.extui %47 : vector<46x1xi1> to vector<46x1xi32>
    %49 = arith.sitofp %48 : vector<46x1xi32> to vector<46x1xf32>
    %c0 = arith.constant 0 : index
    %c0_13 = arith.constant 0 : index
    %50 = vector.load %arg0[%c0, %c0_13] : memref<48x224xbf16, #tpu.memory_space<vmem>>, vector<48x224xbf16>
    %c0_14 = arith.constant 0 : index
    %c0_15 = arith.constant 0 : index
    %51 = vector.load %arg1[%c0_14, %c0_15] : memref<224x256xbf16, #tpu.memory_space<vmem>>, vector<224x256xbf16>
    %cst = arith.constant dense<0.000000e+00> : vector<48x256xf32>
    %52 = tpu.matmul %50, %51, %cst {dimension_numbers = #tpu.dot_dimension_numbers<[1], [0], [0], [1], [0, 0, 1, 1], [], []>} : vector<48x224xbf16>, vector<224x256xbf16>, vector<48x256xf32> -> vector<48x256xf32>
    %c0_16 = arith.constant 0 : index
    %c0_17 = arith.constant 0 : index
    %53 = vector.load %arg2[%c0_16, %c0_17] : memref<1x256xf32, #tpu.memory_space<vmem>>, vector<1x256xf32>
    %54 = vector.broadcast %53 : vector<1x256xf32> to vector<48x256xf32>
    %55 = arith.addf %52, %54 : vector<48x256xf32>
    %cst_18 = arith.constant 0.000000e+00 : f32
    %56 = vector.broadcast %cst_18 : f32 to vector<48x256xf32>
    %57 = arith.maximumf %55, %56 : vector<48x256xf32>
    %58 = arith.truncf %57 : vector<48x256xf32> to vector<48x256xbf16>
    %c0_19 = arith.constant 0 : index
    %c0_20 = arith.constant 0 : index
    %59 = vector.load %arg3[%c0_19, %c0_20] : memref<256x128xbf16, #tpu.memory_space<vmem>>, vector<256x128xbf16>
    %cst_21 = arith.constant dense<0.000000e+00> : vector<48x128xf32>
    %60 = tpu.matmul %58, %59, %cst_21 {dimension_numbers = #tpu.dot_dimension_numbers<[1], [0], [0], [1], [0, 0, 1, 1], [], []>} : vector<48x256xbf16>, vector<256x128xbf16>, vector<48x128xf32> -> vector<48x128xf32>
    %c0_22 = arith.constant 0 : index
    %c0_23 = arith.constant 0 : index
    %61 = vector.load %arg4[%c0_22, %c0_23] : memref<1x128xf32, #tpu.memory_space<vmem>>, vector<1x128xf32>
    %62 = vector.broadcast %61 : vector<1x128xf32> to vector<48x128xf32>
    %63 = arith.addf %60, %62 : vector<48x128xf32>
    %c0_24 = arith.constant 0 : index
    %c0_25 = arith.constant 0 : index
    %64 = vector.load %arg5[%c0_24, %c0_25] : memref<1x128xf32, #tpu.memory_space<vmem>>, vector<1x128xf32>
    %c0_26 = arith.constant 0 : index
    %c0_27 = arith.constant 0 : index
    %65 = vector.load %arg6[%c0_26, %c0_27] : memref<1x128xf32, #tpu.memory_space<vmem>>, vector<1x128xf32>
    %66 = vector.broadcast %23 : vector<48x1xf32> to vector<48x128xf32>
    %67 = arith.mulf %63, %66 : vector<48x128xf32>
    %cst_28 = arith.constant dense<0.000000e+00> : vector<128xf32>
    %68 = vector.multi_reduction <add>, %67, %cst_28 [0] : vector<48x128xf32> to vector<128xf32>
    %69 = vector.shape_cast %68 : vector<128xf32> to vector<1x128xf32>
    %70 = arith.mulf %67, %67 : vector<48x128xf32>
    %cst_29 = arith.constant dense<0.000000e+00> : vector<128xf32>
    %71 = vector.multi_reduction <add>, %70, %cst_29 [0] : vector<48x128xf32> to vector<128xf32>
    %72 = vector.shape_cast %71 : vector<128xf32> to vector<1x128xf32>
    %cst_30 = arith.constant 3.125000e-02 : f32
    %73 = vector.broadcast %cst_30 : f32 to vector<1x128xf32>
    %74 = arith.mulf %69, %73 : vector<1x128xf32>
    %cst_31 = arith.constant 3.125000e-02 : f32
    %75 = vector.broadcast %cst_31 : f32 to vector<1x128xf32>
    %76 = arith.mulf %72, %75 : vector<1x128xf32>
    %77 = arith.mulf %74, %74 : vector<1x128xf32>
    %78 = arith.subf %76, %77 : vector<1x128xf32>
    %cst_32 = arith.constant 0.000000e+00 : f32
    %79 = vector.broadcast %cst_32 : f32 to vector<1x128xf32>
    %80 = arith.maximumf %78, %79 : vector<1x128xf32>
    %cst_33 = arith.constant 9.99999974E-6 : f32
    %81 = vector.broadcast %cst_33 : f32 to vector<1x128xf32>
    %82 = arith.addf %80, %81 : vector<1x128xf32>
    %83 = math.rsqrt %82 : vector<1x128xf32>
    %84 = arith.mulf %64, %83 : vector<1x128xf32>
    %85 = arith.mulf %74, %84 : vector<1x128xf32>
    %86 = arith.subf %65, %85 : vector<1x128xf32>
    %87 = vector.broadcast %84 : vector<1x128xf32> to vector<48x128xf32>
    %88 = arith.mulf %63, %87 : vector<48x128xf32>
    %89 = vector.broadcast %86 : vector<1x128xf32> to vector<48x128xf32>
    %90 = arith.addf %88, %89 : vector<48x128xf32>
    %cst_34 = arith.constant 0.000000e+00 : f32
    %91 = vector.broadcast %cst_34 : f32 to vector<48x128xf32>
    %92 = arith.maximumf %90, %91 : vector<48x128xf32>
    %93 = vector.broadcast %23 : vector<48x1xf32> to vector<48x128xf32>
    %94 = arith.mulf %92, %93 : vector<48x128xf32>
    %95 = arith.truncf %94 : vector<48x128xf32> to vector<48x128xbf16>
    %96 = vector.extract_strided_slice %95 {offsets = [0, 0], sizes = [46, 128], strides = [1, 1]} : vector<48x128xbf16> to vector<46x128xbf16>
    %97 = vector.extract_strided_slice %95 {offsets = [1, 0], sizes = [46, 128], strides = [1, 1]} : vector<48x128xbf16> to vector<46x128xbf16>
    %98 = vector.extract_strided_slice %95 {offsets = [2, 0], sizes = [46, 128], strides = [1, 1]} : vector<48x128xbf16> to vector<46x128xbf16>
    %99 = tpu.concatenate %96, %97, %98 in 1 : vector<46x128xbf16>, vector<46x128xbf16>, vector<46x128xbf16> -> vector<46x384xbf16>
    %c0_35 = arith.constant 0 : index
    %c0_36 = arith.constant 0 : index
    %100 = vector.load %arg7[%c0_35, %c0_36] : memref<384x128xbf16, #tpu.memory_space<vmem>>, vector<384x128xbf16>
    %cst_37 = arith.constant dense<0.000000e+00> : vector<46x128xf32>
    %101 = tpu.matmul %99, %100, %cst_37 {dimension_numbers = #tpu.dot_dimension_numbers<[1], [0], [0], [1], [0, 0, 1, 1], [], []>} : vector<46x384xbf16>, vector<384x128xbf16>, vector<46x128xf32> -> vector<46x128xf32>
    %c0_38 = arith.constant 0 : index
    %c0_39 = arith.constant 0 : index
    %102 = vector.load %arg8[%c0_38, %c0_39] : memref<1x128xf32, #tpu.memory_space<vmem>>, vector<1x128xf32>
    %103 = vector.broadcast %102 : vector<1x128xf32> to vector<46x128xf32>
    %104 = arith.addf %101, %103 : vector<46x128xf32>
    %c0_40 = arith.constant 0 : index
    %c0_41 = arith.constant 0 : index
    %105 = vector.load %arg9[%c0_40, %c0_41] : memref<1x128xf32, #tpu.memory_space<vmem>>, vector<1x128xf32>
    %c0_42 = arith.constant 0 : index
    %c0_43 = arith.constant 0 : index
    %106 = vector.load %arg10[%c0_42, %c0_43] : memref<1x128xf32, #tpu.memory_space<vmem>>, vector<1x128xf32>
    %107 = vector.broadcast %49 : vector<46x1xf32> to vector<46x128xf32>
    %108 = arith.mulf %104, %107 : vector<46x128xf32>
    %cst_44 = arith.constant dense<0.000000e+00> : vector<128xf32>
    %109 = vector.multi_reduction <add>, %108, %cst_44 [0] : vector<46x128xf32> to vector<128xf32>
    %110 = vector.shape_cast %109 : vector<128xf32> to vector<1x128xf32>
    %111 = arith.mulf %108, %108 : vector<46x128xf32>
    %cst_45 = arith.constant dense<0.000000e+00> : vector<128xf32>
    %112 = vector.multi_reduction <add>, %111, %cst_45 [0] : vector<46x128xf32> to vector<128xf32>
    %113 = vector.shape_cast %112 : vector<128xf32> to vector<1x128xf32>
    %cst_46 = arith.constant 3.125000e-02 : f32
    %114 = vector.broadcast %cst_46 : f32 to vector<1x128xf32>
    %115 = arith.mulf %110, %114 : vector<1x128xf32>
    %cst_47 = arith.constant 3.125000e-02 : f32
    %116 = vector.broadcast %cst_47 : f32 to vector<1x128xf32>
    %117 = arith.mulf %113, %116 : vector<1x128xf32>
    %118 = arith.mulf %115, %115 : vector<1x128xf32>
    %119 = arith.subf %117, %118 : vector<1x128xf32>
    %cst_48 = arith.constant 0.000000e+00 : f32
    %120 = vector.broadcast %cst_48 : f32 to vector<1x128xf32>
    %121 = arith.maximumf %119, %120 : vector<1x128xf32>
    %cst_49 = arith.constant 9.99999974E-6 : f32
    %122 = vector.broadcast %cst_49 : f32 to vector<1x128xf32>
    %123 = arith.addf %121, %122 : vector<1x128xf32>
    %124 = math.rsqrt %123 : vector<1x128xf32>
    %125 = arith.mulf %105, %124 : vector<1x128xf32>
    %126 = arith.mulf %115, %125 : vector<1x128xf32>
    %127 = arith.subf %106, %126 : vector<1x128xf32>
    %128 = vector.broadcast %125 : vector<1x128xf32> to vector<46x128xf32>
    %129 = arith.mulf %104, %128 : vector<46x128xf32>
    %130 = vector.broadcast %127 : vector<1x128xf32> to vector<46x128xf32>
    %131 = arith.addf %129, %130 : vector<46x128xf32>
    %cst_50 = arith.constant 0.000000e+00 : f32
    %132 = vector.broadcast %cst_50 : f32 to vector<46x128xf32>
    %133 = arith.maximumf %131, %132 : vector<46x128xf32>
    %134 = vector.extract_strided_slice %133 {offsets = [0, 0], sizes = [16, 128], strides = [1, 1]} : vector<46x128xf32> to vector<16x128xf32>
    %cst_51 = arith.constant dense<0xFF800000> : vector<128xf32>
    %135 = vector.multi_reduction <maximumf>, %134, %cst_51 [0] : vector<16x128xf32> to vector<128xf32>
    %136 = vector.shape_cast %135 : vector<128xf32> to vector<1x128xf32>
    %137 = vector.extract_strided_slice %133 {offsets = [24, 0], sizes = [16, 128], strides = [1, 1]} : vector<46x128xf32> to vector<16x128xf32>
    %cst_52 = arith.constant dense<0xFF800000> : vector<128xf32>
    %138 = vector.multi_reduction <maximumf>, %137, %cst_52 [0] : vector<16x128xf32> to vector<128xf32>
    %139 = vector.shape_cast %138 : vector<128xf32> to vector<1x128xf32>
    %140 = tpu.concatenate %136, %139 in 0 : vector<1x128xf32>, vector<1x128xf32> -> vector<2x128xf32>
    %c0_53 = arith.constant 0 : index
    %c0_54 = arith.constant 0 : index
    %141 = vector.load %arg11[%c0_53, %c0_54] : memref<128x128xf32, #tpu.memory_space<vmem>>, vector<128x128xf32>
    %cst_55 = arith.constant dense<0.000000e+00> : vector<2x128xf32>
    %142 = tpu.matmul %140, %141, %cst_55 {dimension_numbers = #tpu.dot_dimension_numbers<[1], [0], [0], [1], [0, 0, 1, 1], [], []>} : vector<2x128xf32>, vector<128x128xf32>, vector<2x128xf32> -> vector<2x128xf32>
    %c0_56 = arith.constant 0 : index
    %c0_57 = arith.constant 0 : index
    %143 = vector.load %arg12[%c0_56, %c0_57] : memref<1x128xf32, #tpu.memory_space<vmem>>, vector<1x128xf32>
    %144 = vector.broadcast %143 : vector<1x128xf32> to vector<2x128xf32>
    %145 = arith.addf %142, %144 : vector<2x128xf32>
    %cst_58 = arith.constant dense<0.000000e+00> : vector<128xf32>
    %146 = vector.multi_reduction <add>, %145, %cst_58 [0] : vector<2x128xf32> to vector<128xf32>
    %147 = vector.shape_cast %146 : vector<128xf32> to vector<1x128xf32>
    %cst_59 = arith.constant 2.000000e+00 : f32
    %148 = vector.broadcast %cst_59 : f32 to vector<1x128xf32>
    %149 = arith.divf %147, %148 : vector<1x128xf32>
    %150 = vector.broadcast %149 : vector<1x128xf32> to vector<2x128xf32>
    %151 = arith.subf %145, %150 : vector<2x128xf32>
    %152 = arith.mulf %151, %151 : vector<2x128xf32>
    %cst_60 = arith.constant dense<0.000000e+00> : vector<128xf32>
    %153 = vector.multi_reduction <add>, %152, %cst_60 [0] : vector<2x128xf32> to vector<128xf32>
    %154 = vector.shape_cast %153 : vector<128xf32> to vector<1x128xf32>
    %cst_61 = arith.constant 2.000000e+00 : f32
    %155 = vector.broadcast %cst_61 : f32 to vector<1x128xf32>
    %156 = arith.divf %154, %155 : vector<1x128xf32>
    %157 = vector.broadcast %149 : vector<1x128xf32> to vector<2x128xf32>
    %158 = arith.subf %145, %157 : vector<2x128xf32>
    %cst_62 = arith.constant 9.99999974E-6 : f32
    %159 = vector.broadcast %cst_62 : f32 to vector<1x128xf32>
    %160 = arith.addf %156, %159 : vector<1x128xf32>
    %161 = math.rsqrt %160 : vector<1x128xf32>
    %162 = vector.broadcast %161 : vector<1x128xf32> to vector<2x128xf32>
    %163 = arith.mulf %158, %162 : vector<2x128xf32>
    %c0_63 = arith.constant 0 : index
    %c0_64 = arith.constant 0 : index
    %164 = vector.load %arg13[%c0_63, %c0_64] : memref<1x128xf32, #tpu.memory_space<vmem>>, vector<1x128xf32>
    %165 = vector.broadcast %164 : vector<1x128xf32> to vector<2x128xf32>
    %166 = arith.mulf %163, %165 : vector<2x128xf32>
    %c0_65 = arith.constant 0 : index
    %c0_66 = arith.constant 0 : index
    %167 = vector.load %arg14[%c0_65, %c0_66] : memref<1x128xf32, #tpu.memory_space<vmem>>, vector<1x128xf32>
    %168 = vector.broadcast %167 : vector<1x128xf32> to vector<2x128xf32>
    %169 = arith.addf %166, %168 : vector<2x128xf32>
    %c0_67 = arith.constant 0 : index
    %c0_68 = arith.constant 0 : index
    %170 = vector.load %arg15[%c0_67, %c0_68] : memref<2x128xf32, #tpu.memory_space<vmem>>, vector<2x128xf32>
    tpu.vector_store %arg15[%c0_67, %c0_68], %169 {strides = array<i32>} : memref<2x128xf32, #tpu.memory_space<vmem>>, vector<2x128xf32>,
    return
  }
}

</mosaic_0001>

<llo_original>
// kernel: tcr_extractor_forward.1
$region0: #{tcr_extractor_forward.1}
  #allocation0 [shape = 'u32[]', space=smem, size = 0x4, offset = 0x4, fixed_abs, tag = 'smem constant byte address 0x4 - core index']
  #allocation1 [shape = 'u32[72,128]{1,0:T(1,128)}', space=vmem, size = 0x9000, scoped, tag = 'internal scratch']
  %s0 = inlined_call_operand.vmem [shape: bf16[48,224], index: 0, kind: input, shape index: {}]
  %s1 = inlined_call_operand.vmem [shape: bf16[224,256], index: 1, kind: input, shape index: {}]
  %s2 = inlined_call_operand.vmem [shape: f32[1,256], index: 2, kind: input, shape index: {}]
  %s3 = inlined_call_operand.vmem [shape: bf16[256,128], index: 3, kind: input, shape index: {}]
  %s4 = inlined_call_operand.vmem [shape: f32[1,128], index: 4, kind: input, shape index: {}]
  %s5 = inlined_call_operand.vmem [shape: f32[1,128], index: 5, kind: input, shape index: {}]
  %s6 = inlined_call_operand.vmem [shape: f32[1,128], index: 6, kind: input, shape index: {}]
  %s7 = inlined_call_operand.vmem [shape: bf16[384,128], index: 7, kind: input, shape index: {}]
  %s8 = inlined_call_operand.vmem [shape: f32[1,128], index: 8, kind: input, shape index: {}]
  %s9 = inlined_call_operand.vmem [shape: f32[1,128], index: 9, kind: input, shape index: {}]
  %s10 = inlined_call_operand.vmem [shape: f32[1,128], index: 10, kind: input, shape index: {}]
  %s11 = inlined_call_operand.vmem [shape: f32[128,128], index: 11, kind: input, shape index: {}]
  %s12 = inlined_call_operand.vmem [shape: f32[1,128], index: 12, kind: input, shape index: {}]
  %s13 = inlined_call_operand.vmem [shape: f32[1,128], index: 13, kind: input, shape index: {}]
  %s14 = inlined_call_operand.vmem [shape: f32[1,128], index: 14, kind: input, shape index: {}]
  %s15 = inlined_call_operand.hbm [shape: f32[2,128], index: 15, kind: output, shape index: {}]
  %s16 = sld [smem:[#allocation0]]
  $region70: #{tcr_extractor_forward.1} parent=0
    _
  %s18 = ssub.s32 1, %s16
  %s19 = scalar_select 0, %s18, %s16
  $region1: #{tcr_extractor_forward.1} parent=0
    #allocation2 [shape = 'u8[1024]{0}', space=vmem, size = 0x400, scoped, tag = 'output window, operand 0, single buffered']
    #allocation3 [shape = 's32[1]{0}', space=sflag, size = 0x4, scoped, tag = 'scoped memory for tcr_extractor_forward.1']
    %20 = vsyncpa [#allocation3], 0
    // Predicated region
    $region2: #{tcr_extractor_forward.1} parent=1 // pred_check
      _
    $region3: #{tcr_extractor_forward.1} parent=1 // pred_check_branch
      %22 = sbr.rel (0) target = $region5
    $region4: #{tcr_extractor_forward.1} parent=1 // pred_region
      _
    $region5: #{tcr_extractor_forward.1} parent=1 // pred_fallthru
      _
    // Predicated region
    $region6: #{tcr_extractor_forward.1} parent=1 // pred_check
      _
    $region7: #{tcr_extractor_forward.1} parent=1 // pred_check_branch
      %24 = sbr.rel (0) target = $region9
    $region8: #{tcr_extractor_forward.1} parent=1 // pred_region
      _
    $region9: #{tcr_extractor_forward.1} parent=1 // pred_fallthru
      _
    // Predicated region
    $region10: #{tcr_extractor_forward.1} parent=1 // pred_check
      _
    $region11: #{tcr_extractor_forward.1} parent=1 // pred_check_branch
      %26 = sbr.rel (0) target = $region13
    $region12: #{tcr_extractor_forward.1} parent=1 // pred_region
      _
    $region13: #{tcr_extractor_forward.1} parent=1 // pred_fallthru
      _
    // Predicated region
    $region14: #{tcr_extractor_forward.1} parent=1 // pred_check
      _
    $region15: #{tcr_extractor_forward.1} parent=1 // pred_check_branch
      %28 = sbr.rel (0) target = $region17
    $region16: #{tcr_extractor_forward.1} parent=1 // pred_region
      _
    $region17: #{tcr_extractor_forward.1} parent=1 // pred_fallthru
      _
    // Predicated region
    $region18: #{tcr_extractor_forward.1} parent=1 // pred_check
      _
    $region19: #{tcr_extractor_forward.1} parent=1 // pred_check_branch
      %30 = sbr.rel (0) target = $region21
    $region20: #{tcr_extractor_forward.1} parent=1 // pred_region
      _
    $region21: #{tcr_extractor_forward.1} parent=1 // pred_fallthru
      _
    // Predicated region
    $region22: #{tcr_extractor_forward.1} parent=1 // pred_check
      _
    $region23: #{tcr_extractor_forward.1} parent=1 // pred_check_branch
      %32 = sbr.rel (0) target = $region25
    $region24: #{tcr_extractor_forward.1} parent=1 // pred_region
      _
    $region25: #{tcr_extractor_forward.1} parent=1 // pred_fallthru
      _
    // Predicated region
    $region26: #{tcr_extractor_forward.1} parent=1 // pred_check
      _
    $region27: #{tcr_extractor_forward.1} parent=1 // pred_check_branch
      %34 = sbr.rel (0) target = $region29
    $region28: #{tcr_extractor_forward.1} parent=1 // pred_region
      _
    $region29: #{tcr_extractor_forward.1} parent=1 // pred_fallthru
      _
    // Predicated region
    $region30: #{tcr_extractor_forward.1} parent=1 // pred_check
      _
    $region31: #{tcr_extractor_forward.1} parent=1 // pred_check_branch
      %36 = sbr.rel (0) target = $region33
    $region32: #{tcr_extractor_forward.1} parent=1 // pred_region
      _
    $region33: #{tcr_extractor_forward.1} parent=1 // pred_fallthru
      _
    // Predicated region
    $region34: #{tcr_extractor_forward.1} parent=1 // pred_check
      _
    $region35: #{tcr_extractor_forward.1} parent=1 // pred_check_branch
      %38 = sbr.rel (0) target = $region37
    $region36: #{tcr_extractor_forward.1} parent=1 // pred_region
      _
    $region37: #{tcr_extractor_forward.1} parent=1 // pred_fallthru
      _
    // Predicated region
    $region38: #{tcr_extractor_forward.1} parent=1 // pred_check
      _
    $region39: #{tcr_extractor_forward.1} parent=1 // pred_check_branch
      %40 = sbr.rel (0) target = $region41
    $region40: #{tcr_extractor_forward.1} parent=1 // pred_region
      _
    $region41: #{tcr_extractor_forward.1} parent=1 // pred_fallthru
      _
    // Predicated region
    $region42: #{tcr_extractor_forward.1} parent=1 // pred_check
      _
    $region43: #{tcr_extractor_forward.1} parent=1 // pred_check_branch
      %42 = sbr.rel (0) target = $region45
    $region44: #{tcr_extractor_forward.1} parent=1 // pred_region
      _
    $region45: #{tcr_extractor_forward.1} parent=1 // pred_fallthru
      _
    // Predicated region
    $region46: #{tcr_extractor_forward.1} parent=1 // pred_check
      _
    $region47: #{tcr_extractor_forward.1} parent=1 // pred_check_branch
      %44 = sbr.rel (0) target = $region49
    $region48: #{tcr_extractor_forward.1} parent=1 // pred_region
      _
    $region49: #{tcr_extractor_forward.1} parent=1 // pred_fallthru
      _
    // Predicated region
    $region50: #{tcr_extractor_forward.1} parent=1 // pred_check
      _
    $region51: #{tcr_extractor_forward.1} parent=1 // pred_check_branch
      %46 = sbr.rel (0) target = $region53
    $region52: #{tcr_extractor_forward.1} parent=1 // pred_region
      _
    $region53: #{tcr_extractor_forward.1} parent=1 // pred_fallthru
      _
    // Predicated region
    $region54: #{tcr_extractor_forward.1} parent=1 // pred_check
      _
    $region55: #{tcr_extractor_forward.1} parent=1 // pred_check_branch
      %48 = sbr.rel (0) target = $region57
    $region56: #{tcr_extractor_forward.1} parent=1 // pred_region
      _
    $region57: #{tcr_extractor_forward.1} parent=1 // pred_fallthru
      _
    // Predicated region
    $region58: #{tcr_extractor_forward.1} parent=1 // pred_check
      _
    $region59: #{tcr_extractor_forward.1} parent=1 // pred_check_branch
      %50 = sbr.rel (0) target = $region61
    $region60: #{tcr_extractor_forward.1} parent=1 // pred_region
      _
    $region61: #{tcr_extractor_forward.1} parent=1 // pred_fallthru
      _
    %v52 = vlaneseq
    %v53 = vshrl.u32 %v52, 7
    %v54 = vadd.s32 %v53, 8
    %v55 = vadd.s32 %v53, 16
    %v56 = vadd.s32 %v53, 24
    %v57 = vadd.s32 %v53, 32
    %v58 = vadd.s32 %v53, 40
    %vm59 = vcmp.lt.s32.totalorder %v53, 0
    %v60 = vsub.s32 0, %v53
    %v61 = vsel %vm59, %v60, %v53
    %v62 = vand.u32 %v61, 65535
    %v63 = vshrl.u32 %v61, 16
    %v65 = vmul.u32 %v62, 43691
    %v66 = vmul.u32 %v62, 43690
    %v67 = vmul.u32 %v63, 43691
    %v68 = vmul.u32 %v63, 43690
    %v69 = vshll.u32 %v66, 16
    %v70 = vshrl.u32 %v66, 16
    %v71 = vshll.u32 %v67, 16
    %v72 = vshrl.u32 %v67, 16
    %vm73 = vc.u32 %v65, %v69
    %v74 = vsel %vm73, 1, 0
    %v75 = vadd.s32 %v65, %v69
    %v76 = vadd.s32 %v68, %v74
    %vm77 = vc.u32 %v75, %v71
    %v78 = vsel %vm77, 1, 0
    %v79 = vadd.s32 %v75, %v71
    %v80 = vadd.s32 %v76, %v78
    %v81 = vadd.s32 %v80, %v70
    %v82 = vadd.s32 %v81, %v72
    %v83 = vshrl.u32 %v82, 4
    %v84 = vmul.u32 %v83, 24
    %v85 = vsub.s32 %v61, %v84
    %v86 = vsub.s32 0, %v85
    %v87 = vsel %vm59, %v86, %v85
    %vm88 = vcmp.lt.s32.totalorder %v54, 0
    %v89 = vsub.s32 0, %v54
    %v90 = vsel %vm88, %v89, %v54
    %v91 = vand.u32 %v90, 65535
    %v92 = vshrl.u32 %v90, 16
    %v94 = vmul.u32 %v91, 43691
    %v95 = vmul.u32 %v91, 43690
    %v96 = vmul.u32 %v92, 43691
    %v97 = vmul.u32 %v92, 43690
    %v98 = vshll.u32 %v95, 16
    %v99 = vshrl.u32 %v95, 16
    %v100 = vshll.u32 %v96, 16
    %v101 = vshrl.u32 %v96, 16
    %vm102 = vc.u32 %v94, %v98
    %v103 = vsel %vm102, 1, 0
    %v104 = vadd.s32 %v94, %v98
    %v105 = vadd.s32 %v97, %v103
    %vm106 = vc.u32 %v104, %v100
    %v107 = vsel %vm106, 1, 0
    %v108 = vadd.s32 %v104, %v100
    %v109 = vadd.s32 %v105, %v107
    %v110 = vadd.s32 %v109, %v99
    %v111 = vadd.s32 %v110, %v101
    %v112 = vshrl.u32 %v111, 4
    %v113 = vmul.u32 %v112, 24
    %v114 = vsub.s32 %v90, %v113
    %v115 = vsub.s32 0, %v114
    %v116 = vsel %vm88, %v115, %v114
    %vm117 = vcmp.lt.s32.totalorder %v55, 0
    %v118 = vsub.s32 0, %v55
    %v119 = vsel %vm117, %v118, %v55
    %v120 = vand.u32 %v119, 65535
    %v121 = vshrl.u32 %v119, 16
    %v123 = vmul.u32 %v120, 43691
    %v124 = vmul.u32 %v120, 43690
    %v125 = vmul.u32 %v121, 43691
    %v126 = vmul.u32 %v121, 43690
    %v127 = vshll.u32 %v124, 16
    %v128 = vshrl.u32 %v124, 16
    %v129 = vshll.u32 %v125, 16
    %v130 = vshrl.u32 %v125, 16
    %vm131 = vc.u32 %v123, %v127
    %v132 = vsel %vm131, 1, 0
    %v133 = vadd.s32 %v123, %v127
    %v134 = vadd.s32 %v126, %v132
    %vm135 = vc.u32 %v133, %v129
    %v136 = vsel %vm135, 1, 0
    %v137 = vadd.s32 %v133, %v129
    %v138 = vadd.s32 %v134, %v136
    %v139 = vadd.s32 %v138, %v128
    %v140 = vadd.s32 %v139, %v130
    %v141 = vshrl.u32 %v140, 4
    %v142 = vmul.u32 %v141, 24
    %v143 = vsub.s32 %v119, %v142
    %v144 = vsub.s32 0, %v143
    %v145 = vsel %vm117, %v144, %v143
    %vm146 = vcmp.lt.s32.totalorder %v56, 0
    %v147 = vsub.s32 0, %v56
    %v148 = vsel %vm146, %v147, %v56
    %v149 = vand.u32 %v148, 65535
    %v150 = vshrl.u32 %v148, 16
    %v152 = vmul.u32 %v149, 43691
    %v153 = vmul.u32 %v149, 43690
    %v154 = vmul.u32 %v150, 43691
    %v155 = vmul.u32 %v150, 43690
    %v156 = vshll.u32 %v153, 16
    %v157 = vshrl.u32 %v153, 16
    %v158 = vshll.u32 %v154, 16
    %v159 = vshrl.u32 %v154, 16
    %vm160 = vc.u32 %v152, %v156
    %v161 = vsel %vm160, 1, 0
    %v162 = vadd.s32 %v152, %v156
    %v163 = vadd.s32 %v155, %v161
    %vm164 = vc.u32 %v162, %v158
    %v165 = vsel %vm164, 1, 0
    %v166 = vadd.s32 %v162, %v158
    %v167 = vadd.s32 %v163, %v165
    %v168 = vadd.s32 %v167, %v157
    %v169 = vadd.s32 %v168, %v159
    %v170 = vshrl.u32 %v169, 4
    %v171 = vmul.u32 %v170, 24
    %v172 = vsub.s32 %v148, %v171
    %v173 = vsub.s32 0, %v172
    %v174 = vsel %vm146, %v173, %v172
    %vm175 = vcmp.lt.s32.totalorder %v57, 0
    %v176 = vsub.s32 0, %v57
    %v177 = vsel %vm175, %v176, %v57
    %v178 = vand.u32 %v177, 65535
    %v179 = vshrl.u32 %v177, 16
    %v181 = vmul.u32 %v178, 43691
    %v182 = vmul.u32 %v178, 43690
    %v183 = vmul.u32 %v179, 43691
    %v184 = vmul.u32 %v179, 43690
    %v185 = vshll.u32 %v182, 16
    %v186 = vshrl.u32 %v182, 16
    %v187 = vshll.u32 %v183, 16
    %v188 = vshrl.u32 %v183, 16
    %vm189 = vc.u32 %v181, %v185
    %v190 = vsel %vm189, 1, 0
    %v191 = vadd.s32 %v181, %v185
    %v192 = vadd.s32 %v184, %v190
    %vm193 = vc.u32 %v191, %v187
    %v194 = vsel %vm193, 1, 0
    %v195 = vadd.s32 %v191, %v187
    %v196 = vadd.s32 %v192, %v194
    %v197 = vadd.s32 %v196, %v186
    %v198 = vadd.s32 %v197, %v188
    %v199 = vshrl.u32 %v198, 4
    %v200 = vmul.u32 %v199, 24
    %v201 = vsub.s32 %v177, %v200
    %v202 = vsub.s32 0, %v201
    %v203 = vsel %vm175, %v202, %v201
    %vm204 = vcmp.lt.s32.totalorder %v58, 0
    %v205 = vsub.s32 0, %v58
    %v206 = vsel %vm204, %v205, %v58
    %v207 = vand.u32 %v206, 65535
    %v208 = vshrl.u32 %v206, 16
    %v210 = vmul.u32 %v207, 43691
    %v211 = vmul.u32 %v207, 43690
    %v212 = vmul.u32 %v208, 43691
    %v213 = vmul.u32 %v208, 43690
    %v214 = vshll.u32 %v211, 16
    %v215 = vshrl.u32 %v211, 16
    %v216 = vshll.u32 %v212, 16
    %v217 = vshrl.u32 %v212, 16
    %vm218 = vc.u32 %v210, %v214
    %v219 = vsel %vm218, 1, 0
    %v220 = vadd.s32 %v210, %v214
    %v221 = vadd.s32 %v213, %v219
    %vm222 = vc.u32 %v220, %v216
    %v223 = vsel %vm222, 1, 0
    %v224 = vadd.s32 %v220, %v216
    %v225 = vadd.s32 %v221, %v223
    %v226 = vadd.s32 %v225, %v215
    %v227 = vadd.s32 %v226, %v217
    %v228 = vshrl.u32 %v227, 4
    %v229 = vmul.u32 %v228, 24
    %v230 = vsub.s32 %v206, %v229
    %v231 = vsub.s32 0, %v230
    %v232 = vsel %vm204, %v231, %v230
    %vm233 = vcmp.ne.s32.totalorder %v87, 0
    %vm234 = vcmp.ne.s32.totalorder %v116, 0
    %vm235 = vcmp.ne.s32.totalorder %v145, 0
    %vm236 = vcmp.ne.s32.totalorder %v174, 0
    %vm237 = vcmp.ne.s32.totalorder %v203, 0
    %vm238 = vcmp.ne.s32.totalorder %v232, 0
    %vm239 = vcmp.lt.s32.totalorder %v87, 0
    %vm240 = vcmp.lt.s32.totalorder %v116, 0
    %vm241 = vcmp.lt.s32.totalorder %v145, 0
    %vm242 = vcmp.lt.s32.totalorder %v174, 0
    %vm243 = vcmp.lt.s32.totalorder %v203, 0
    %vm244 = vcmp.lt.s32.totalorder %v232, 0
    %vm245 = vmand %vm239, %vm233
    %vm246 = vmand %vm240, %vm234
    %vm247 = vmand %vm241, %vm235
    %vm248 = vmand %vm242, %vm236
    %vm249 = vmand %vm243, %vm237
    %vm250 = vmand %vm244, %vm238
    %v251 = vadd.s32 %v87, 24
    %v252 = vadd.s32 %v116, 24
    %v253 = vadd.s32 %v145, 24
    %v254 = vadd.s32 %v174, 24
    %v255 = vadd.s32 %v203, 24
    %v256 = vadd.s32 %v232, 24
    %v257 = vsel %vm245, %v251, %v87
    %v258 = vsel %vm246, %v252, %v116
    %v259 = vsel %vm247, %v253, %v145
    %v260 = vsel %vm248, %v254, %v174
    %v261 = vsel %vm249, %v255, %v203
    %v262 = vsel %vm250, %v256, %v232
    %vm263 = vcmp.ge.s32.totalorder %v257, 1
    %vm264 = vcmp.ge.s32.totalorder %v258, 1
    %vm265 = vcmp.ge.s32.totalorder %v259, 1
    %vm266 = vcmp.ge.s32.totalorder %v260, 1
    %vm267 = vcmp.ge.s32.totalorder %v261, 1
    %vm268 = vcmp.ge.s32.totalorder %v262, 1
    %vm269 = vcmp.le.s32.totalorder %v257, 16
    %vm270 = vcmp.le.s32.totalorder %v258, 16
    %vm271 = vcmp.le.s32.totalorder %v259, 16
    %vm272 = vcmp.le.s32.totalorder %v260, 16
    %vm273 = vcmp.le.s32.totalorder %v261, 16
    %vm274 = vcmp.le.s32.totalorder %v262, 16
    %vm275 = vmand %vm263, %vm269
    %vm276 = vmand %vm264, %vm270
    %vm277 = vmand %vm265, %vm271
    %vm278 = vmand %vm266, %vm272
    %vm279 = vmand %vm267, %vm273
    %vm280 = vmand %vm268, %vm274
    %v281 = vsel %vm275, 1, 0
    %v282 = vsel %vm276, 1, 0
    %v283 = vsel %vm277, 1, 0
    %v284 = vsel %vm278, 1, 0
    %v285 = vsel %vm279, 1, 0
    %v286 = vsel %vm280, 1, 0
    %v287 = vcvt.s32.f32 %v281
    %v288 = vcvt.s32.f32 %v282
    %v289 = vcvt.s32.f32 %v283
    %v290 = vcvt.s32.f32 %v284
    %v291 = vcvt.s32.f32 %v285
    %v292 = vcvt.s32.f32 %v286
    %v293 = vadd.s32 %v53, 1
    %v294 = vadd.s32 %v54, 1
    %v295 = vadd.s32 %v55, 1
    %v296 = vadd.s32 %v56, 1
    %v297 = vadd.s32 %v57, 1
    %v298 = vadd.s32 %v58, 1
    %vm299 = vcmp.lt.s32.totalorder %v293, 0
    %v300 = vsub.s32 0, %v293
    %v301 = vsel %vm299, %v300, %v293
    %v302 = vand.u32 %v301, 65535
    %v303 = vshrl.u32 %v301, 16
    %v305 = vmul.u32 %v302, 43691
    %v306 = vmul.u32 %v302, 43690
    %v307 = vmul.u32 %v303, 43691
    %v308 = vmul.u32 %v303, 43690
    %v309 = vshll.u32 %v306, 16
    %v310 = vshrl.u32 %v306, 16
    %v311 = vshll.u32 %v307, 16
    %v312 = vshrl.u32 %v307, 16
    %vm313 = vc.u32 %v305, %v309
    %v314 = vsel %vm313, 1, 0
    %v315 = vadd.s32 %v305, %v309
    %v316 = vadd.s32 %v308, %v314
    %vm317 = vc.u32 %v315, %v311
    %v318 = vsel %vm317, 1, 0
    %v319 = vadd.s32 %v315, %v311
    %v320 = vadd.s32 %v316, %v318
    %v321 = vadd.s32 %v320, %v310
    %v322 = vadd.s32 %v321, %v312
    %v323 = vshrl.u32 %v322, 4
    %v324 = vmul.u32 %v323, 24
    %v325 = vsub.s32 %v301, %v324
    %v326 = vsub.s32 0, %v325
    %v327 = vsel %vm299, %v326, %v325
    %vm328 = vcmp.lt.s32.totalorder %v294, 0
    %v329 = vsub.s32 0, %v294
    %v330 = vsel %vm328, %v329, %v294
    %v331 = vand.u32 %v330, 65535
    %v332 = vshrl.u32 %v330, 16
    %v334 = vmul.u32 %v331, 43691
    %v335 = vmul.u32 %v331, 43690
    %v336 = vmul.u32 %v332, 43691
    %v337 = vmul.u32 %v332, 43690
    %v338 = vshll.u32 %v335, 16
    %v339 = vshrl.u32 %v335, 16
    %v340 = vshll.u32 %v336, 16
    %v341 = vshrl.u32 %v336, 16
    %vm342 = vc.u32 %v334, %v338
    %v343 = vsel %vm342, 1, 0
    %v344 = vadd.s32 %v334, %v338
    %v345 = vadd.s32 %v337, %v343
    %vm346 = vc.u32 %v344, %v340
    %v347 = vsel %vm346, 1, 0
    %v348 = vadd.s32 %v344, %v340
    %v349 = vadd.s32 %v345, %v347
    %v350 = vadd.s32 %v349, %v339
    %v351 = vadd.s32 %v350, %v341
    %v352 = vshrl.u32 %v351, 4
    %v353 = vmul.u32 %v352, 24
    %v354 = vsub.s32 %v330, %v353
    %v355 = vsub.s32 0, %v354
    %v356 = vsel %vm328, %v355, %v354
    %vm357 = vcmp.lt.s32.totalorder %v295, 0
    %v358 = vsub.s32 0, %v295
    %v359 = vsel %vm357, %v358, %v295
    %v360 = vand.u32 %v359, 65535
    %v361 = vshrl.u32 %v359, 16
    %v363 = vmul.u32 %v360, 43691
    %v364 = vmul.u32 %v360, 43690
    %v365 = vmul.u32 %v361, 43691
    %v366 = vmul.u32 %v361, 43690
    %v367 = vshll.u32 %v364, 16
    %v368 = vshrl.u32 %v364, 16
    %v369 = vshll.u32 %v365, 16
    %v370 = vshrl.u32 %v365, 16
    %vm371 = vc.u32 %v363, %v367
    %v372 = vsel %vm371, 1, 0
    %v373 = vadd.s32 %v363, %v367
    %v374 = vadd.s32 %v366, %v372
    %vm375 = vc.u32 %v373, %v369
    %v376 = vsel %vm375, 1, 0
    %v377 = vadd.s32 %v373, %v369
    %v378 = vadd.s32 %v374, %v376
    %v379 = vadd.s32 %v378, %v368
    %v380 = vadd.s32 %v379, %v370
    %v381 = vshrl.u32 %v380, 4
    %v382 = vmul.u32 %v381, 24
    %v383 = vsub.s32 %v359, %v382
    %v384 = vsub.s32 0, %v383
    %v385 = vsel %vm357, %v384, %v383
    %vm386 = vcmp.lt.s32.totalorder %v296, 0
    %v387 = vsub.s32 0, %v296
    %v388 = vsel %vm386, %v387, %v296
    %v389 = vand.u32 %v388, 65535
    %v390 = vshrl.u32 %v388, 16
    %v392 = vmul.u32 %v389, 43691
    %v393 = vmul.u32 %v389, 43690
    %v394 = vmul.u32 %v390, 43691
    %v395 = vmul.u32 %v390, 43690
    %v396 = vshll.u32 %v393, 16
    %v397 = vshrl.u32 %v393, 16
    %v398 = vshll.u32 %v394, 16
    %v399 = vshrl.u32 %v394, 16
    %vm400 = vc.u32 %v392, %v396
    %v401 = vsel %vm400, 1, 0
    %v402 = vadd.s32 %v392, %v396
    %v403 = vadd.s32 %v395, %v401
    %vm404 = vc.u32 %v402, %v398
    %v405 = vsel %vm404, 1, 0
    %v406 = vadd.s32 %v402, %v398
    %v407 = vadd.s32 %v403, %v405
    %v408 = vadd.s32 %v407, %v397
    %v409 = vadd.s32 %v408, %v399
    %v410 = vshrl.u32 %v409, 4
    %v411 = vmul.u32 %v410, 24
    %v412 = vsub.s32 %v388, %v411
    %v413 = vsub.s32 0, %v412
    %v414 = vsel %vm386, %v413, %v412
    %vm415 = vcmp.lt.s32.totalorder %v297, 0
    %v416 = vsub.s32 0, %v297
    %v417 = vsel %vm415, %v416, %v297
    %v418 = vand.u32 %v417, 65535
    %v419 = vshrl.u32 %v417, 16
    %v421 = vmul.u32 %v418, 43691
    %v422 = vmul.u32 %v418, 43690
    %v423 = vmul.u32 %v419, 43691
    %v424 = vmul.u32 %v419, 43690
    %v425 = vshll.u32 %v422, 16
    %v426 = vshrl.u32 %v422, 16
    %v427 = vshll.u32 %v423, 16
    %v428 = vshrl.u32 %v423, 16
    %vm429 = vc.u32 %v421, %v425
    %v430 = vsel %vm429, 1, 0
    %v431 = vadd.s32 %v421, %v425
    %v432 = vadd.s32 %v424, %v430
    %vm433 = vc.u32 %v431, %v427
    %v434 = vsel %vm433, 1, 0
    %v435 = vadd.s32 %v431, %v427
    %v436 = vadd.s32 %v432, %v434
    %v437 = vadd.s32 %v436, %v426
    %v438 = vadd.s32 %v437, %v428
    %v439 = vshrl.u32 %v438, 4
    %v440 = vmul.u32 %v439, 24
    %v441 = vsub.s32 %v417, %v440
    %v442 = vsub.s32 0, %v441
    %v443 = vsel %vm415, %v442, %v441
    %vm444 = vcmp.lt.s32.totalorder %v298, 0
    %v445 = vsub.s32 0, %v298
    %v446 = vsel %vm444, %v445, %v298
    %v447 = vand.u32 %v446, 65535
    %v448 = vshrl.u32 %v446, 16
    %v450 = vmul.u32 %v447, 43691
    %v451 = vmul.u32 %v447, 43690
    %v452 = vmul.u32 %v448, 43691
    %v453 = vmul.u32 %v448, 43690
    %v454 = vshll.u32 %v451, 16
    %v455 = vshrl.u32 %v451, 16
    %v456 = vshll.u32 %v452, 16
    %v457 = vshrl.u32 %v452, 16
    %vm458 = vc.u32 %v450, %v454
    %v459 = vsel %vm458, 1, 0
    %v460 = vadd.s32 %v450, %v454
    %v461 = vadd.s32 %v453, %v459
    %vm462 = vc.u32 %v460, %v456
    %v463 = vsel %vm462, 1, 0
    %v464 = vadd.s32 %v460, %v456
    %v465 = vadd.s32 %v461, %v463
    %v466 = vadd.s32 %v465, %v455
    %v467 = vadd.s32 %v466, %v457
    %v468 = vshrl.u32 %v467, 4
    %v469 = vmul.u32 %v468, 24
    %v470 = vsub.s32 %v446, %v469
    %v471 = vsub.s32 0, %v470
    %v472 = vsel %vm444, %v471, %v470
    %vm473 = vcmp.ne.s32.totalorder %v327, 0
    %vm474 = vcmp.ne.s32.totalorder %v356, 0
    %vm475 = vcmp.ne.s32.totalorder %v385, 0
    %vm476 = vcmp.ne.s32.totalorder %v414, 0
    %vm477 = vcmp.ne.s32.totalorder %v443, 0
    %vm478 = vcmp.ne.s32.totalorder %v472, 0
    %vm479 = vcmp.lt.s32.totalorder %v327, 0
    %vm480 = vcmp.lt.s32.totalorder %v356, 0
    %vm481 = vcmp.lt.s32.totalorder %v385, 0
    %vm482 = vcmp.lt.s32.totalorder %v414, 0
    %vm483 = vcmp.lt.s32.totalorder %v443, 0
    %vm484 = vcmp.lt.s32.totalorder %v472, 0
    %vm485 = vmand %vm479, %vm473
    %vm486 = vmand %vm480, %vm474
    %vm487 = vmand %vm481, %vm475
    %vm488 = vmand %vm482, %vm476
    %vm489 = vmand %vm483, %vm477
    %vm490 = vmand %vm484, %vm478
    %v491 = vadd.s32 %v327, 24
    %v492 = vadd.s32 %v356, 24
    %v493 = vadd.s32 %v385, 24
    %v494 = vadd.s32 %v414, 24
    %v495 = vadd.s32 %v443, 24
    %v496 = vadd.s32 %v472, 24
    %v497 = vsel %vm485, %v491, %v327
    %v498 = vsel %vm486, %v492, %v356
    %v499 = vsel %vm487, %v493, %v385
    %v500 = vsel %vm488, %v494, %v414
    %v501 = vsel %vm489, %v495, %v443
    %v502 = vsel %vm490, %v496, %v472
    %vm503 = vcmp.ge.s32.totalorder %v497, 1
    %vm504 = vcmp.ge.s32.totalorder %v498, 1
    %vm505 = vcmp.ge.s32.totalorder %v499, 1
    %vm506 = vcmp.ge.s32.totalorder %v500, 1
    %vm507 = vcmp.ge.s32.totalorder %v501, 1
    %vm508 = vcmp.ge.s32.totalorder %v502, 1
    %vm509 = vcmp.le.s32.totalorder %v497, 16
    %vm510 = vcmp.le.s32.totalorder %v498, 16
    %vm511 = vcmp.le.s32.totalorder %v499, 16
    %vm512 = vcmp.le.s32.totalorder %v500, 16
    %vm513 = vcmp.le.s32.totalorder %v501, 16
    %vm514 = vcmp.le.s32.totalorder %v502, 16
    %vm515 = vmand %vm503, %vm509
    %vm516 = vmand %vm504, %vm510
    %vm517 = vmand %vm505, %vm511
    %vm518 = vmand %vm506, %vm512
    %vm519 = vmand %vm507, %vm513
    %vm520 = vmand %vm508, %vm514
    %v521 = vsel %vm515, 1, 0
    %v522 = vsel %vm516, 1, 0
    %v523 = vsel %vm517, 1, 0
    %v524 = vsel %vm518, 1, 0
    %v525 = vsel %vm519, 1, 0
    %v526 = vsel %vm520, 1, 0
    %v527 = vcvt.s32.f32 %v521
    %v528 = vcvt.s32.f32 %v522
    %v529 = vcvt.s32.f32 %v523
    %v530 = vcvt.s32.f32 %v524
    %v531 = vcvt.s32.f32 %v525
    %v532 = vcvt.s32.f32 %v526
    %v533 = vld [vmem:[%s0] sm:$0xff]
    %v534 = vld [vmem:[%s0 + $0x8] sm:$0xff]
    %v535 = vld [vmem:[%s0 + $0x10] sm:$0xff]
    %v536 = vld [vmem:[%s0 + $0x18] sm:$0xff]
    %v537 = vld [vmem:[%s0 + $0x20] sm:$0xff]
    %v538 = vld [vmem:[%s0 + $0x28] sm:$0xff]
    %v539 = vld [vmem:[%s1] sm:$0xff]
    %v540 = vld [vmem:[%s1 + $0x8] sm:$0xff]
    %v541 = vld [vmem:[%s1 + $0x10] sm:$0xff]
    %v542 = vld [vmem:[%s1 + $0x18] sm:$0xff]
    %v543 = vld [vmem:[%s1 + $0x20] sm:$0xff]
    %v544 = vld [vmem:[%s1 + $0x28] sm:$0xff]
    %v545 = vld [vmem:[%s1 + $0x30] sm:$0xff]
    %v546 = vld [vmem:[%s1 + $0x38] sm:$0xff]
    %v547 = vld [vmem:[%s1 + $0x40] sm:$0xff]
    %v548 = vld [vmem:[%s1 + $0x48] sm:$0xff]
    %v549 = vld [vmem:[%s1 + $0x50] sm:$0xff]
    %v550 = vld [vmem:[%s1 + $0x58] sm:$0xff]
    %v551 = vld [vmem:[%s1 + $0x60] sm:$0xff]
    %v552 = vld [vmem:[%s1 + $0x68] sm:$0xff]
    %v553 = vld [vmem:[%s1 + $0x70] sm:$0xff]
    %v554 = vld [vmem:[%s1 + $0x78] sm:$0xff]
    %v555 = vld [vmem:[%s1 + $0x80] sm:$0xff]
    %v556 = vld [vmem:[%s1 + $0x88] sm:$0xff]
    %v557 = vld [vmem:[%s1 + $0x90] sm:$0xff]
    %v558 = vld [vmem:[%s1 + $0x98] sm:$0xff]
    %v559 = vld [vmem:[%s1 + $0xa0] sm:$0xff]
    %v560 = vld [vmem:[%s1 + $0xa8] sm:$0xff]
    %v561 = vld [vmem:[%s1 + $0xb0] sm:$0xff]
    %v562 = vld [vmem:[%s1 + $0xb8] sm:$0xff]
    %v563 = vld [vmem:[%s1 + $0xc0] sm:$0xff]
    %v564 = vld [vmem:[%s1 + $0xc8] sm:$0xff]
    %v565 = vld [vmem:[%s1 + $0xd0] sm:$0xff]
    %v566 = vld [vmem:[%s1 + $0xd8] sm:$0xff]
    %v567 = vld [vmem:[%s2] sm:$0x3]
    %v569 = vperm.slane %v567, 0
    %v570 = vperm.slane %v567, 1
    %v579 = vunpack.c.l.b16 %v533
    %v580 = vunpack.c.h.b16 %v533
    %v581 = vunpack.c.l.b16 %v534
    %v582 = vunpack.c.h.b16 %v534
    %v583 = vunpack.c.l.b16 %v535
    %v584 = vunpack.c.h.b16 %v535
    %v585 = vunpack.c.l.b16 %v536
    %v586 = vunpack.c.h.b16 %v536
    %v587 = vunpack.c.l.b16 %v537
    %v588 = vunpack.c.h.b16 %v537
    %v589 = vunpack.c.l.b16 %v538
    %v590 = vunpack.c.h.b16 %v538
    %v591 = vpack.c.b16 %v581, %v579
    %v592 = vpack.c.b16 %v582, %v580
    %v593 = vpack.c.b16 %v585, %v583
    %v594 = vpack.c.b16 %v586, %v584
    %v595 = vpack.c.b16 %v589, %v587
    %v596 = vpack.c.b16 %v590, %v588
    %v628 = vunpack.c.l.b16 %v539
    %v629 = vunpack.c.h.b16 %v539
    %v630 = vunpack.c.l.b16 %v540
    %v631 = vunpack.c.h.b16 %v540
    %v632 = vunpack.c.l.b16 %v541
    %v633 = vunpack.c.h.b16 %v541
    %v634 = vunpack.c.l.b16 %v542
    %v635 = vunpack.c.h.b16 %v542
    %v636 = vunpack.c.l.b16 %v543
    %v637 = vunpack.c.h.b16 %v543
    %v638 = vunpack.c.l.b16 %v544
    %v639 = vunpack.c.h.b16 %v544
    %v640 = vunpack.c.l.b16 %v545
    %v641 = vunpack.c.h.b16 %v545
    %v642 = vunpack.c.l.b16 %v546
    %v643 = vunpack.c.h.b16 %v546
    %v644 = vunpack.c.l.b16 %v547
    %v645 = vunpack.c.h.b16 %v547
    %v646 = vunpack.c.l.b16 %v548
    %v647 = vunpack.c.h.b16 %v548
    %v648 = vunpack.c.l.b16 %v549
    %v649 = vunpack.c.h.b16 %v549
    %v650 = vunpack.c.l.b16 %v550
    %v651 = vunpack.c.h.b16 %v550
    %v652 = vunpack.c.l.b16 %v551
    %v653 = vunpack.c.h.b16 %v551
    %v654 = vunpack.c.l.b16 %v552
    %v655 = vunpack.c.h.b16 %v552
    %v656 = vunpack.c.l.b16 %v553
    %v657 = vunpack.c.h.b16 %v553
    %v658 = vunpack.c.l.b16 %v554
    %v659 = vunpack.c.h.b16 %v554
    %v660 = vunpack.c.l.b16 %v555
    %v661 = vunpack.c.h.b16 %v555
    %v662 = vunpack.c.l.b16 %v556
    %v663 = vunpack.c.h.b16 %v556
    %v664 = vunpack.c.l.b16 %v557
    %v665 = vunpack.c.h.b16 %v557
    %v666 = vunpack.c.l.b16 %v558
    %v667 = vunpack.c.h.b16 %v558
    %v668 = vunpack.c.l.b16 %v559
    %v669 = vunpack.c.h.b16 %v559
    %v670 = vunpack.c.l.b16 %v560
    %v671 = vunpack.c.h.b16 %v560
    %v672 = vunpack.c.l.b16 %v561
    %v673 = vunpack.c.h.b16 %v561
    %v674 = vunpack.c.l.b16 %v562
    %v675 = vunpack.c.h.b16 %v562
    %v676 = vunpack.c.l.b16 %v563
    %v677 = vunpack.c.h.b16 %v563
    %v678 = vunpack.c.l.b16 %v564
    %v679 = vunpack.c.h.b16 %v564
    %v680 = vunpack.c.l.b16 %v565
    %v681 = vunpack.c.h.b16 %v565
    %v682 = vunpack.c.l.b16 %v566
    %v683 = vunpack.c.h.b16 %v566
    %v684 = vpack.c.b16 %v630, %v628
    %v685 = vpack.c.b16 %v631, %v629
    %v686 = vpack.c.b16 %v634, %v632
    %v687 = vpack.c.b16 %v635, %v633
    %v688 = vpack.c.b16 %v638, %v636
    %v689 = vpack.c.b16 %v639, %v637
    %v690 = vpack.c.b16 %v642, %v640
    %v691 = vpack.c.b16 %v643, %v641
    %v692 = vpack.c.b16 %v646, %v644
    %v693 = vpack.c.b16 %v647, %v645
    %v694 = vpack.c.b16 %v650, %v648
    %v695 = vpack.c.b16 %v651, %v649
    %v696 = vpack.c.b16 %v654, %v652
    %v697 = vpack.c.b16 %v655, %v653
    %v698 = vpack.c.b16 %v658, %v656
    %v699 = vpack.c.b16 %v659, %v657
    %v700 = vpack.c.b16 %v662, %v660
    %v701 = vpack.c.b16 %v663, %v661
    %v702 = vpack.c.b16 %v666, %v664
    %v703 = vpack.c.b16 %v667, %v665
    %v704 = vpack.c.b16 %v670, %v668
    %v705 = vpack.c.b16 %v671, %v669
    %v706 = vpack.c.b16 %v674, %v672
    %v707 = vpack.c.b16 %v675, %v673
    %v708 = vpack.c.b16 %v678, %v676
    %v709 = vpack.c.b16 %v679, %v677
    %v710 = vpack.c.b16 %v682, %v680
    %v711 = vpack.c.b16 %v683, %v681
    %vm740 = vcmask 785408
    %v742 = vsel %vm740, %v592, 0
    %v745 = vsel %vm740, %v594, 0
    %v748 = vsel %vm740, %v596, 0
    %750 = vmatpush.bf16.msra.mxu0 %v698
    %751 = vmatpush.bf16.msra.mxu0 %v696
    %752 = vmatpush.bf16.msra.mxu0 %v694
    %753 = vmatpush.bf16.msra.mxu0 %v692
    %754 = vmatpush.bf16.msra.mxu0 %v690
    %755 = vmatpush.bf16.msra.mxu0 %v688
    %756 = vmatpush.bf16.msra.mxu0 %v686
    %757 = vmatpush.bf16.msra.mxu0 %v684
    %758 = vmatmul.bf16.gmra.mxu0 %v591
    %v759 = vpop.f32.mrf.mxu0
    %v760 = vadd.f32 %v569, %v759
    %v761 = vpop.f32.mrf.mxu0
    %v762 = vadd.f32 %v569, %v761
    %763 = vmatmul.bf16.gmra.mxu0 %v593
    %v764 = vpop.f32.mrf.mxu0
    %v765 = vadd.f32 %v569, %v764
    %v766 = vpop.f32.mrf.mxu0
    %v767 = vadd.f32 %v569, %v766
    %768 = vmatmul.bf16.gmra.mxu0 %v595
    %v769 = vpop.f32.mrf.mxu0
    %v770 = vadd.f32 %v569, %v769
    %v771 = vpop.f32.mrf.mxu0
    %v772 = vadd.f32 %v569, %v771
    %773 = vdwg.mxu0
    %774 = vmatpush.bf16.msra.mxu0 0
    %775 = vmatpush.bf16.msra.mxu0 0
    %776 = vmatpush.bf16.msra.mxu0 %v710
    %777 = vmatpush.bf16.msra.mxu0 %v708
    %778 = vmatpush.bf16.msra.mxu0 %v706
    %779 = vmatpush.bf16.msra.mxu0 %v704
    %780 = vmatpush.bf16.msra.mxu0 %v702
    %781 = vmatpush.bf16.msra.mxu0 %v700
    %782 = vmatmul.bf16.gmra.mxu0 %v742
    %v783 = vpop.f32.mrf.mxu0
    %v784 = vadd.f32 %v760, %v783
    %v785 = vpop.f32.mrf.mxu0
    %v786 = vadd.f32 %v762, %v785
    %787 = vmatmul.bf16.gmra.mxu0 %v745
    %v788 = vpop.f32.mrf.mxu0
    %v789 = vadd.f32 %v765, %v788
    %v790 = vpop.f32.mrf.mxu0
    %v791 = vadd.f32 %v767, %v790
    %792 = vmatmul.bf16.gmra.mxu0 %v748
    %v793 = vpop.f32.mrf.mxu0
    %v794 = vadd.f32 %v770, %v793
    %v795 = vpop.f32.mrf.mxu0
    %v796 = vadd.f32 %v772, %v795
    %797 = vdwg.mxu0
    %798 = vmatpush.bf16.msra.mxu0 %v699
    %799 = vmatpush.bf16.msra.mxu0 %v697
    %800 = vmatpush.bf16.msra.mxu0 %v695
    %801 = vmatpush.bf16.msra.mxu0 %v693
    %802 = vmatpush.bf16.msra.mxu0 %v691
    %803 = vmatpush.bf16.msra.mxu0 %v689
    %804 = vmatpush.bf16.msra.mxu0 %v687
    %805 = vmatpush.bf16.msra.mxu0 %v685
    %806 = vmatmul.bf16.gmra.mxu0 %v591
    %v807 = vpop.f32.mrf.mxu0
    %v808 = vadd.f32 %v570, %v807
    %v809 = vpop.f32.mrf.mxu0
    %v810 = vadd.f32 %v570, %v809
    %811 = vmatmul.bf16.gmra.mxu0 %v593
    %v812 = vpop.f32.mrf.mxu0
    %v813 = vadd.f32 %v570, %v812
    %v814 = vpop.f32.mrf.mxu0
    %v815 = vadd.f32 %v570, %v814
    %816 = vmatmul.bf16.gmra.mxu0 %v595
    %v817 = vpop.f32.mrf.mxu0
    %v818 = vadd.f32 %v570, %v817
    %v819 = vpop.f32.mrf.mxu0
    %v820 = vadd.f32 %v570, %v819
    %821 = vdwg.mxu0
    %822 = vmatpush.bf16.msra.mxu0 0
    %823 = vmatpush.bf16.msra.mxu0 0
    %824 = vmatpush.bf16.msra.mxu0 %v711
    %825 = vmatpush.bf16.msra.mxu0 %v709
    %826 = vmatpush.bf16.msra.mxu0 %v707
    %827 = vmatpush.bf16.msra.mxu0 %v705
    %828 = vmatpush.bf16.msra.mxu0 %v703
    %829 = vmatpush.bf16.msra.mxu0 %v701
    %830 = vmatmul.bf16.gmra.mxu0 %v742
    %v831 = vpop.f32.mrf.mxu0
    %v832 = vadd.f32 %v808, %v831
    %v833 = vpop.f32.mrf.mxu0
    %v834 = vadd.f32 %v810, %v833
    %835 = vmatmul.bf16.gmra.mxu0 %v745
    %v836 = vpop.f32.mrf.mxu0
    %v837 = vadd.f32 %v813, %v836
    %v838 = vpop.f32.mrf.mxu0
    %v839 = vadd.f32 %v815, %v838
    %840 = vmatmul.bf16.gmra.mxu0 %v748
    %v841 = vpop.f32.mrf.mxu0
    %v842 = vadd.f32 %v818, %v841
    %v843 = vpop.f32.mrf.mxu0
    %v844 = vadd.f32 %v820, %v843
    %845 = vdwg.mxu0
    %v846 = vmax.f32 %v784, 0.0
    %v847 = vmax.f32 %v832, 0.0
    %v848 = vmax.f32 %v786, 0.0
    %v849 = vmax.f32 %v834, 0.0
    %v850 = vmax.f32 %v789, 0.0
    %v851 = vmax.f32 %v837, 0.0
    %v852 = vmax.f32 %v791, 0.0
    %v853 = vmax.f32 %v839, 0.0
    %v854 = vmax.f32 %v794, 0.0
    %v855 = vmax.f32 %v842, 0.0
    %v856 = vmax.f32 %v796, 0.0
    %v857 = vmax.f32 %v844, 0.0
    %v858 = vpack.c.bf16 %v848, %v846
    %v859 = vpack.c.bf16 %v849, %v847
    %v860 = vpack.c.bf16 %v852, %v850
    %v861 = vpack.c.bf16 %v853, %v851
    %v862 = vpack.c.bf16 %v856, %v854
    %v863 = vpack.c.bf16 %v857, %v855
    %v864 = vld [vmem:[%s3] sm:$0xf]
    %v865 = vld [vmem:[%s3 + $0x4] sm:$0xf]
    %v866 = vld [vmem:[%s3 + $0x8] sm:$0xf]
    %v867 = vld [vmem:[%s3 + $0xc] sm:$0xf]
    %v868 = vld [vmem:[%s3 + $0x10] sm:$0xf]
    %v869 = vld [vmem:[%s3 + $0x14] sm:$0xf]
    %v870 = vld [vmem:[%s3 + $0x18] sm:$0xf]
    %v871 = vld [vmem:[%s3 + $0x1c] sm:$0xf]
    %v872 = vld [vmem:[%s3 + $0x20] sm:$0xf]
    %v873 = vld [vmem:[%s3 + $0x24] sm:$0xf]
    %v874 = vld [vmem:[%s3 + $0x28] sm:$0xf]
    %v875 = vld [vmem:[%s3 + $0x2c] sm:$0xf]
    %v876 = vld [vmem:[%s3 + $0x30] sm:$0xf]
    %v877 = vld [vmem:[%s3 + $0x34] sm:$0xf]
    %v878 = vld [vmem:[%s3 + $0x38] sm:$0xf]
    %v879 = vld [vmem:[%s3 + $0x3c] sm:$0xf]
    %v880 = vld [vmem:[%s3 + $0x40] sm:$0xf]
    %v881 = vld [vmem:[%s3 + $0x44] sm:$0xf]
    %v882 = vld [vmem:[%s3 + $0x48] sm:$0xf]
    %v883 = vld [vmem:[%s3 + $0x4c] sm:$0xf]
    %v884 = vld [vmem:[%s3 + $0x50] sm:$0xf]
    %v885 = vld [vmem:[%s3 + $0x54] sm:$0xf]
    %v886 = vld [vmem:[%s3 + $0x58] sm:$0xf]
    %v887 = vld [vmem:[%s3 + $0x5c] sm:$0xf]
    %v888 = vld [vmem:[%s3 + $0x60] sm:$0xf]
    %v889 = vld [vmem:[%s3 + $0x64] sm:$0xf]
    %v890 = vld [vmem:[%s3 + $0x68] sm:$0xf]
    %v891 = vld [vmem:[%s3 + $0x6c] sm:$0xf]
    %v892 = vld [vmem:[%s3 + $0x70] sm:$0xf]
    %v893 = vld [vmem:[%s3 + $0x74] sm:$0xf]
    %v894 = vld [vmem:[%s3 + $0x78] sm:$0xf]
    %v895 = vld [vmem:[%s3 + $0x7c] sm:$0xf]
    %v896 = vld [vmem:[%s4] sm:$0x1]
    %v898 = vperm.slane %v896, 0
    %v932 = vunpack.c.l.b16 %v864
    %v933 = vunpack.c.l.b16 %v865
    %v934 = vunpack.c.l.b16 %v866
    %v935 = vunpack.c.l.b16 %v867
    %v936 = vunpack.c.l.b16 %v868
    %v937 = vunpack.c.l.b16 %v869
    %v938 = vunpack.c.l.b16 %v870
    %v939 = vunpack.c.l.b16 %v871
    %v940 = vunpack.c.l.b16 %v872
    %v941 = vunpack.c.l.b16 %v873
    %v942 = vunpack.c.l.b16 %v874
    %v943 = vunpack.c.l.b16 %v875
    %v944 = vunpack.c.l.b16 %v876
    %v945 = vunpack.c.l.b16 %v877
    %v946 = vunpack.c.l.b16 %v878
    %v947 = vunpack.c.l.b16 %v879
    %v948 = vunpack.c.l.b16 %v880
    %v949 = vunpack.c.l.b16 %v881
    %v950 = vunpack.c.l.b16 %v882
    %v951 = vunpack.c.l.b16 %v883
    %v952 = vunpack.c.l.b16 %v884
    %v953 = vunpack.c.l.b16 %v885
    %v954 = vunpack.c.l.b16 %v886
    %v955 = vunpack.c.l.b16 %v887
    %v956 = vunpack.c.l.b16 %v888
    %v957 = vunpack.c.l.b16 %v889
    %v958 = vunpack.c.l.b16 %v890
    %v959 = vunpack.c.l.b16 %v891
    %v960 = vunpack.c.l.b16 %v892
    %v961 = vunpack.c.l.b16 %v893
    %v962 = vunpack.c.l.b16 %v894
    %v963 = vunpack.c.l.b16 %v895
    %v964 = vpack.c.b16 %v933, %v932
    %v965 = vpack.c.b16 %v935, %v934
    %v966 = vpack.c.b16 %v937, %v936
    %v967 = vpack.c.b16 %v939, %v938
    %v968 = vpack.c.b16 %v941, %v940
    %v969 = vpack.c.b16 %v943, %v942
    %v970 = vpack.c.b16 %v945, %v944
    %v971 = vpack.c.b16 %v947, %v946
    %v972 = vpack.c.b16 %v949, %v948
    %v973 = vpack.c.b16 %v951, %v950
    %v974 = vpack.c.b16 %v953, %v952
    %v975 = vpack.c.b16 %v955, %v954
    %v976 = vpack.c.b16 %v957, %v956
    %v977 = vpack.c.b16 %v959, %v958
    %v978 = vpack.c.b16 %v961, %v960
    %v979 = vpack.c.b16 %v963, %v962
    %996 = vmatpush.bf16.msra.mxu0 %v971
    %997 = vmatpush.bf16.msra.mxu0 %v970
    %998 = vmatpush.bf16.msra.mxu0 %v969
    %999 = vmatpush.bf16.msra.mxu0 %v968
    %1000 = vmatpush.bf16.msra.mxu0 %v967
    %1001 = vmatpush.bf16.msra.mxu0 %v966
    %1002 = vmatpush.bf16.msra.mxu0 %v965
    %1003 = vmatpush.bf16.msra.mxu0 %v964
    %1004 = vmatmul.bf16.gmra.mxu0 %v858
    %v1005 = vpop.f32.mrf.mxu0
    %v1006 = vadd.f32 %v898, %v1005
    %v1007 = vpop.f32.mrf.mxu0
    %v1008 = vadd.f32 %v898, %v1007
    %1009 = vmatmul.bf16.gmra.mxu0 %v860
    %v1010 = vpop.f32.mrf.mxu0
    %v1011 = vadd.f32 %v898, %v1010
    %v1012 = vpop.f32.mrf.mxu0
    %v1013 = vadd.f32 %v898, %v1012
    %1014 = vmatmul.bf16.gmra.mxu0 %v862
    %v1015 = vpop.f32.mrf.mxu0
    %v1016 = vadd.f32 %v898, %v1015
    %v1017 = vpop.f32.mrf.mxu0
    %v1018 = vadd.f32 %v898, %v1017
    %1019 = vdwg.mxu0
    %1020 = vmatpush.bf16.msra.mxu0 %v979
    %1021 = vmatpush.bf16.msra.mxu0 %v978
    %1022 = vmatpush.bf16.msra.mxu0 %v977
    %1023 = vmatpush.bf16.msra.mxu0 %v976
    %1024 = vmatpush.bf16.msra.mxu0 %v975
    %1025 = vmatpush.bf16.msra.mxu0 %v974
    %1026 = vmatpush.bf16.msra.mxu0 %v973
    %1027 = vmatpush.bf16.msra.mxu0 %v972
    %1028 = vmatmul.bf16.gmra.mxu0 %v859
    %v1029 = vpop.f32.mrf.mxu0
    %v1030 = vadd.f32 %v1006, %v1029
    %v1031 = vpop.f32.mrf.mxu0
    %v1032 = vadd.f32 %v1008, %v1031
    %1033 = vmatmul.bf16.gmra.mxu0 %v861
    %v1034 = vpop.f32.mrf.mxu0
    %v1035 = vadd.f32 %v1011, %v1034
    %v1036 = vpop.f32.mrf.mxu0
    %v1037 = vadd.f32 %v1013, %v1036
    %1038 = vmatmul.bf16.gmra.mxu0 %v863
    %v1039 = vpop.f32.mrf.mxu0
    %v1040 = vadd.f32 %v1016, %v1039
    %v1041 = vpop.f32.mrf.mxu0
    %v1042 = vadd.f32 %v1018, %v1041
    %1043 = vdwg.mxu0
    %v1044 = vld [vmem:[%s5] sm:$0x1]
    %v1045 = vld [vmem:[%s6] sm:$0x1]
    %v1046 = vmul.f32 %v1030, %v287
    %v1047 = vmul.f32 %v1032, %v288
    %v1048 = vmul.f32 %v1035, %v289
    %v1049 = vmul.f32 %v1037, %v290
    %v1050 = vmul.f32 %v1040, %v291
    %v1051 = vmul.f32 %v1042, %v292
    %v1052 = vadd.f32 %v1046, %v1047
    %v1053 = vadd.f32 %v1052, %v1048
    %v1054 = vadd.f32 %v1053, %v1049
    %v1055 = vadd.f32 %v1054, %v1050
    %v1056 = vadd.f32 %v1055, %v1051
    %v1057 = vrot.slane %v1056, 4
    %v1058 = vadd.f32 %v1056, %v1057
    %v1059 = vrot.slane %v1058, 2
    %v1060 = vadd.f32 %v1058, %v1059
    %v1061 = vrot.slane %v1060, 1
    %v1062 = vadd.f32 %v1060, %v1061
    %v1063 = vmul.f32 %v1046, %v1046
    %v1064 = vmul.f32 %v1047, %v1047
    %v1065 = vmul.f32 %v1048, %v1048
    %v1066 = vmul.f32 %v1049, %v1049
    %v1067 = vmul.f32 %v1050, %v1050
    %v1068 = vmul.f32 %v1051, %v1051
    %v1069 = vadd.f32 %v1063, %v1064
    %v1070 = vadd.f32 %v1069, %v1065
    %v1071 = vadd.f32 %v1070, %v1066
    %v1072 = vadd.f32 %v1071, %v1067
    %v1073 = vadd.f32 %v1072, %v1068
    %v1074 = vrot.slane %v1073, 4
    %v1075 = vadd.f32 %v1073, %v1074
    %v1076 = vrot.slane %v1075, 2
    %v1077 = vadd.f32 %v1075, %v1076
    %v1078 = vrot.slane %v1077, 1
    %v1079 = vadd.f32 %v1077, %v1078
    %v1080 = vmul.f32 %v1062, 0.03125
    %v1081 = vmul.f32 %v1079, 0.03125
    %v1082 = vmul.f32 %v1080, %v1080
    %v1083 = vsub.f32 %v1081, %v1082
    %v1084 = vmax.f32 %v1083, 0.0
    %v1085 = vadd.f32 %v1084, 1e-05
    %v1086 = vrsqrt.pop %v1085
    %v1087 = vmul.f32 %v1086, %v1085
    %v1088 = vmul.f32 %v1087, %v1086
    %v1089 = vmul.f32 0.5, %v1088
    %v1090 = vsub.f32 1.5, %v1089
    %v1091 = vmul.f32 %v1086, %v1090
    %vm1092 = vweird.f32 %v1085
    %vm1093 = vweird.f32 %v1086
    %vm1094 = vmor %vm1092, %vm1093
    %v1095 = vsel %vm1094, %v1086, %v1091
    %v1096 = vmul.f32 %v1044, %v1095
    %v1097 = vmul.f32 %v1080, %v1096
    %v1098 = vsub.f32 %v1045, %v1097
    %v1100 = vperm.slane %v1096, 0
    %v1102 = vmul.f32 %v1030, %v1100
    %v1103 = vmul.f32 %v1032, %v1100
    %v1104 = vmul.f32 %v1035, %v1100
    %v1105 = vmul.f32 %v1037, %v1100
    %v1106 = vmul.f32 %v1040, %v1100
    %v1107 = vmul.f32 %v1042, %v1100
    %v1109 = vperm.slane %v1098, 0
    %v1111 = vadd.f32 %v1102, %v1109
    %v1112 = vadd.f32 %v1103, %v1109
    %v1113 = vadd.f32 %v1104, %v1109
    %v1114 = vadd.f32 %v1105, %v1109
    %v1115 = vadd.f32 %v1106, %v1109
    %v1116 = vadd.f32 %v1107, %v1109
    %v1117 = vmax.f32 %v1111, 0.0
    %v1118 = vmax.f32 %v1112, 0.0
    %v1119 = vmax.f32 %v1113, 0.0
    %v1120 = vmax.f32 %v1114, 0.0
    %v1121 = vmax.f32 %v1115, 0.0
    %v1122 = vmax.f32 %v1116, 0.0
    %v1123 = vmul.f32 %v1117, %v287
    %v1124 = vmul.f32 %v1118, %v288
    %v1125 = vmul.f32 %v1119, %v289
    %v1126 = vmul.f32 %v1120, %v290
    %v1127 = vmul.f32 %v1121, %v291
    %v1128 = vmul.f32 %v1122, %v292
    %v1129 = vpack.c.bf16 %v1123, %v1123
    %v1130 = vpack.c.bf16 %v1124, %v1124
    %v1131 = vpack.c.bf16 %v1125, %v1125
    %v1132 = vpack.c.bf16 %v1126, %v1126
    %v1133 = vpack.c.bf16 %v1127, %v1127
    %v1134 = vpack.c.bf16 %v1128, %v1128
    %v1141 = vunpack.c.l.b16 %v1129
    %v1142 = vunpack.c.l.b16 %v1130
    %v1143 = vunpack.c.l.b16 %v1131
    %v1144 = vunpack.c.l.b16 %v1132
    %v1145 = vunpack.c.l.b16 %v1133
    %v1146 = vunpack.c.l.b16 %v1134
    %v1147 = vpack.c.b16 %v1142, %v1141
    %v1148 = vpack.c.b16 %v1144, %v1143
    %v1149 = vpack.c.b16 %v1146, %v1145
    %vm1153 = vsmask.f32 7424
    %v1155 = vshrl.u32 %v1147, 16
    %v1157 = vshll.u32 %v1147, 16
    %v1159 = vrot.slane %v1157, 1
    %v1160 = vor.u32 %v1155, %v1159
    %v1162 = vshll.u32 %v1148, 16
    %v1164 = vrot.slane %v1162, 1
    %v1165 = vsel %vm1153, %v1160, %v1164
    %v1166 = vshrl.u32 %v1148, 16
    %v1168 = vor.u32 %v1166, %v1164
    %v1170 = vshll.u32 %v1149, 16
    %v1172 = vrot.slane %v1170, 1
    %v1173 = vsel %vm1153, %v1168, %v1172
    %v1174 = vshrl.u32 %v1149, 16
    %v1176 = vor.u32 %v1174, %v1172
    %vm1180 = vcmask 1046528
    %v1181 = vrot.slane %v1147, 1
    %v1182 = vrot.slane %v1148, 1
    %v1183 = vsel %vm1180, %v1181, %v1182
    %v1184 = vrot.slane %v1149, 1
    %v1185 = vsel %vm1180, %v1182, %v1184
    %v1189 = vld [vmem:[%s7] sm:$0xf]
    %v1190 = vld [vmem:[%s7 + $0x4] sm:$0xf]
    %v1191 = vld [vmem:[%s7 + $0x8] sm:$0xf]
    %v1192 = vld [vmem:[%s7 + $0xc] sm:$0xf]
    %v1193 = vld [vmem:[%s7 + $0x10] sm:$0xf]
    %v1194 = vld [vmem:[%s7 + $0x14] sm:$0xf]
    %v1195 = vld [vmem:[%s7 + $0x18] sm:$0xf]
    %v1196 = vld [vmem:[%s7 + $0x1c] sm:$0xf]
    %v1197 = vld [vmem:[%s7 + $0x20] sm:$0xf]
    %v1198 = vld [vmem:[%s7 + $0x24] sm:$0xf]
    %v1199 = vld [vmem:[%s7 + $0x28] sm:$0xf]
    %v1200 = vld [vmem:[%s7 + $0x2c] sm:$0xf]
    %v1201 = vld [vmem:[%s7 + $0x30] sm:$0xf]
    %v1202 = vld [vmem:[%s7 + $0x34] sm:$0xf]
    %v1203 = vld [vmem:[%s7 + $0x38] sm:$0xf]
    %v1204 = vld [vmem:[%s7 + $0x3c] sm:$0xf]
    %v1205 = vld [vmem:[%s7 + $0x40] sm:$0xf]
    %v1206 = vld [vmem:[%s7 + $0x44] sm:$0xf]
    %v1207 = vld [vmem:[%s7 + $0x48] sm:$0xf]
    %v1208 = vld [vmem:[%s7 + $0x4c] sm:$0xf]
    %v1209 = vld [vmem:[%s7 + $0x50] sm:$0xf]
    %v1210 = vld [vmem:[%s7 + $0x54] sm:$0xf]
    %v1211 = vld [vmem:[%s7 + $0x58] sm:$0xf]
    %v1212 = vld [vmem:[%s7 + $0x5c] sm:$0xf]
    %v1213 = vld [vmem:[%s7 + $0x60] sm:$0xf]
    %v1214 = vld [vmem:[%s7 + $0x64] sm:$0xf]
    %v1215 = vld [vmem:[%s7 + $0x68] sm:$0xf]
    %v1216 = vld [vmem:[%s7 + $0x6c] sm:$0xf]
    %v1217 = vld [vmem:[%s7 + $0x70] sm:$0xf]
    %v1218 = vld [vmem:[%s7 + $0x74] sm:$0xf]
    %v1219 = vld [vmem:[%s7 + $0x78] sm:$0xf]
    %v1220 = vld [vmem:[%s7 + $0x7c] sm:$0xf]
    %v1221 = vld [vmem:[%s7 + $0x80] sm:$0xf]
    %v1222 = vld [vmem:[%s7 + $0x84] sm:$0xf]
    %v1223 = vld [vmem:[%s7 + $0x88] sm:$0xf]
    %v1224 = vld [vmem:[%s7 + $0x8c] sm:$0xf]
    %v1225 = vld [vmem:[%s7 + $0x90] sm:$0xf]
    %v1226 = vld [vmem:[%s7 + $0x94] sm:$0xf]
    %v1227 = vld [vmem:[%s7 + $0x98] sm:$0xf]
    %v1228 = vld [vmem:[%s7 + $0x9c] sm:$0xf]
    %v1229 = vld [vmem:[%s7 + $0xa0] sm:$0xf]
    %v1230 = vld [vmem:[%s7 + $0xa4] sm:$0xf]
    %v1231 = vld [vmem:[%s7 + $0xa8] sm:$0xf]
    %v1232 = vld [vmem:[%s7 + $0xac] sm:$0xf]
    %v1233 = vld [vmem:[%s7 + $0xb0] sm:$0xf]
    %v1234 = vld [vmem:[%s7 + $0xb4] sm:$0xf]
    %v1235 = vld [vmem:[%s7 + $0xb8] sm:$0xf]
    %v1236 = vld [vmem:[%s7 + $0xbc] sm:$0xf]
    %v1237 = vld [vmem:[%s8] sm:$0x1]
    %v1239 = vperm.slane %v1237, 0
    %v1289 = vunpack.c.l.b16 %v1189
    %v1290 = vunpack.c.l.b16 %v1190
    %v1291 = vunpack.c.l.b16 %v1191
    %v1292 = vunpack.c.l.b16 %v1192
    %v1293 = vunpack.c.l.b16 %v1193
    %v1294 = vunpack.c.l.b16 %v1194
    %v1295 = vunpack.c.l.b16 %v1195
    %v1296 = vunpack.c.l.b16 %v1196
    %v1297 = vunpack.c.l.b16 %v1197
    %v1298 = vunpack.c.l.b16 %v1198
    %v1299 = vunpack.c.l.b16 %v1199
    %v1300 = vunpack.c.l.b16 %v1200
    %v1301 = vunpack.c.l.b16 %v1201
    %v1302 = vunpack.c.l.b16 %v1202
    %v1303 = vunpack.c.l.b16 %v1203
    %v1304 = vunpack.c.l.b16 %v1204
    %v1305 = vunpack.c.l.b16 %v1205
    %v1306 = vunpack.c.l.b16 %v1206
    %v1307 = vunpack.c.l.b16 %v1207
    %v1308 = vunpack.c.l.b16 %v1208
    %v1309 = vunpack.c.l.b16 %v1209
    %v1310 = vunpack.c.l.b16 %v1210
    %v1311 = vunpack.c.l.b16 %v1211
    %v1312 = vunpack.c.l.b16 %v1212
    %v1313 = vunpack.c.l.b16 %v1213
    %v1314 = vunpack.c.l.b16 %v1214
    %v1315 = vunpack.c.l.b16 %v1215
    %v1316 = vunpack.c.l.b16 %v1216
    %v1317 = vunpack.c.l.b16 %v1217
    %v1318 = vunpack.c.l.b16 %v1218
    %v1319 = vunpack.c.l.b16 %v1219
    %v1320 = vunpack.c.l.b16 %v1220
    %v1321 = vunpack.c.l.b16 %v1221
    %v1322 = vunpack.c.l.b16 %v1222
    %v1323 = vunpack.c.l.b16 %v1223
    %v1324 = vunpack.c.l.b16 %v1224
    %v1325 = vunpack.c.l.b16 %v1225
    %v1326 = vunpack.c.l.b16 %v1226
    %v1327 = vunpack.c.l.b16 %v1227
    %v1328 = vunpack.c.l.b16 %v1228
    %v1329 = vunpack.c.l.b16 %v1229
    %v1330 = vunpack.c.l.b16 %v1230
    %v1331 = vunpack.c.l.b16 %v1231
    %v1332 = vunpack.c.l.b16 %v1232
    %v1333 = vunpack.c.l.b16 %v1233
    %v1334 = vunpack.c.l.b16 %v1234
    %v1335 = vunpack.c.l.b16 %v1235
    %v1336 = vunpack.c.l.b16 %v1236
    %v1337 = vpack.c.b16 %v1290, %v1289
    %v1338 = vpack.c.b16 %v1292, %v1291
    %v1339 = vpack.c.b16 %v1294, %v1293
    %v1340 = vpack.c.b16 %v1296, %v1295
    %v1341 = vpack.c.b16 %v1298, %v1297
    %v1342 = vpack.c.b16 %v1300, %v1299
    %v1343 = vpack.c.b16 %v1302, %v1301
    %v1344 = vpack.c.b16 %v1304, %v1303
    %v1345 = vpack.c.b16 %v1306, %v1305
    %v1346 = vpack.c.b16 %v1308, %v1307
    %v1347 = vpack.c.b16 %v1310, %v1309
    %v1348 = vpack.c.b16 %v1312, %v1311
    %v1349 = vpack.c.b16 %v1314, %v1313
    %v1350 = vpack.c.b16 %v1316, %v1315
    %v1351 = vpack.c.b16 %v1318, %v1317
    %v1352 = vpack.c.b16 %v1320, %v1319
    %v1353 = vpack.c.b16 %v1322, %v1321
    %v1354 = vpack.c.b16 %v1324, %v1323
    %v1355 = vpack.c.b16 %v1326, %v1325
    %v1356 = vpack.c.b16 %v1328, %v1327
    %v1357 = vpack.c.b16 %v1330, %v1329
    %v1358 = vpack.c.b16 %v1332, %v1331
    %v1359 = vpack.c.b16 %v1334, %v1333
    %v1360 = vpack.c.b16 %v1336, %v1335
    %1385 = vmatpush.bf16.msra.mxu0 %v1344
    %1386 = vmatpush.bf16.msra.mxu0 %v1343
    %1387 = vmatpush.bf16.msra.mxu0 %v1342
    %1388 = vmatpush.bf16.msra.mxu0 %v1341
    %1389 = vmatpush.bf16.msra.mxu0 %v1340
    %1390 = vmatpush.bf16.msra.mxu0 %v1339
    %1391 = vmatpush.bf16.msra.mxu0 %v1338
    %1392 = vmatpush.bf16.msra.mxu0 %v1337
    %1393 = vmatmul.bf16.gmra.mxu0 %v1147
    %v1394 = vpop.f32.mrf.mxu0
    %v1395 = vadd.f32 %v1239, %v1394
    %v1396 = vpop.f32.mrf.mxu0
    %v1397 = vadd.f32 %v1239, %v1396
    %1398 = vmatmul.bf16.gmra.mxu0 %v1148
    %v1399 = vpop.f32.mrf.mxu0
    %v1400 = vadd.f32 %v1239, %v1399
    %v1401 = vpop.f32.mrf.mxu0
    %v1402 = vadd.f32 %v1239, %v1401
    %1403 = vmatmul.bf16.gmra.mxu0 %v1149
    %v1404 = vpop.f32.mrf.mxu0
    %v1405 = vadd.f32 %v1239, %v1404
    %v1406 = vpop.f32.mrf.mxu0
    %v1407 = vadd.f32 %v1239, %v1406
    %1408 = vdwg.mxu0
    %1409 = vmatpush.bf16.msra.mxu0 %v1352
    %1410 = vmatpush.bf16.msra.mxu0 %v1351
    %1411 = vmatpush.bf16.msra.mxu0 %v1350
    %1412 = vmatpush.bf16.msra.mxu0 %v1349
    %1413 = vmatpush.bf16.msra.mxu0 %v1348
    %1414 = vmatpush.bf16.msra.mxu0 %v1347
    %1415 = vmatpush.bf16.msra.mxu0 %v1346
    %1416 = vmatpush.bf16.msra.mxu0 %v1345
    %1417 = vmatmul.bf16.gmra.mxu0 %v1165
    %v1418 = vpop.f32.mrf.mxu0
    %v1419 = vadd.f32 %v1395, %v1418
    %v1420 = vpop.f32.mrf.mxu0
    %v1421 = vadd.f32 %v1397, %v1420
    %1422 = vmatmul.bf16.gmra.mxu0 %v1173
    %v1423 = vpop.f32.mrf.mxu0
    %v1424 = vadd.f32 %v1400, %v1423
    %v1425 = vpop.f32.mrf.mxu0
    %v1426 = vadd.f32 %v1402, %v1425
    %1427 = vmatmul.bf16.gmra.mxu0 %v1176
    %v1428 = vpop.f32.mrf.mxu0
    %v1429 = vadd.f32 %v1405, %v1428
    %v1430 = vpop.f32.mrf.mxu0
    %v1431 = vadd.f32 %v1407, %v1430
    %1432 = vdwg.mxu0
    %1433 = vmatpush.bf16.msra.mxu0 %v1360
    %1434 = vmatpush.bf16.msra.mxu0 %v1359
    %1435 = vmatpush.bf16.msra.mxu0 %v1358
    %1436 = vmatpush.bf16.msra.mxu0 %v1357
    %1437 = vmatpush.bf16.msra.mxu0 %v1356
    %1438 = vmatpush.bf16.msra.mxu0 %v1355
    %1439 = vmatpush.bf16.msra.mxu0 %v1354
    %1440 = vmatpush.bf16.msra.mxu0 %v1353
    %1441 = vmatmul.bf16.gmra.mxu0 %v1183
    %v1442 = vpop.f32.mrf.mxu0
    %v1443 = vadd.f32 %v1419, %v1442
    %v1444 = vpop.f32.mrf.mxu0
    %v1445 = vadd.f32 %v1421, %v1444
    %1446 = vmatmul.bf16.gmra.mxu0 %v1185
    %v1447 = vpop.f32.mrf.mxu0
    %v1448 = vadd.f32 %v1424, %v1447
    %v1449 = vpop.f32.mrf.mxu0
    %v1450 = vadd.f32 %v1426, %v1449
    %1451 = vmatmul.bf16.gmra.mxu0 %v1184
    %v1452 = vpop.f32.mrf.mxu0
    %v1453 = vadd.f32 %v1429, %v1452
    %v1454 = vpop.f32.mrf.mxu0
    %v1455 = vadd.f32 %v1431, %v1454
    %1456 = vdwg.mxu0
    %v1457 = vld [vmem:[%s9] sm:$0x1]
    %v1458 = vld [vmem:[%s10] sm:$0x1]
    %v1459 = vmul.f32 %v1443, %v527
    %v1460 = vmul.f32 %v1445, %v528
    %v1461 = vmul.f32 %v1448, %v529
    %v1462 = vmul.f32 %v1450, %v530
    %v1463 = vmul.f32 %v1453, %v531
    %v1464 = vmul.f32 %v1455, %v532
    %v1465 = vadd.f32 %v1459, %v1460
    %v1466 = vadd.f32 %v1465, %v1461
    %v1467 = vadd.f32 %v1466, %v1462
    %v1468 = vadd.f32 %v1467, %v1463
    %vm1469 = vcmask 1045504
    %v1470 = vsel %vm1469, %v1464, 0.0
    %v1471 = vadd.f32 %v1468, %v1470
    %v1472 = vrot.slane %v1471, 4
    %v1473 = vadd.f32 %v1471, %v1472
    %v1474 = vrot.slane %v1473, 2
    %v1475 = vadd.f32 %v1473, %v1474
    %v1476 = vrot.slane %v1475, 1
    %v1477 = vadd.f32 %v1475, %v1476
    %v1478 = vmul.f32 %v1459, %v1459
    %v1479 = vmul.f32 %v1460, %v1460
    %v1480 = vmul.f32 %v1461, %v1461
    %v1481 = vmul.f32 %v1462, %v1462
    %v1482 = vmul.f32 %v1463, %v1463
    %v1483 = vmul.f32 %v1464, %v1464
    %v1484 = vadd.f32 %v1478, %v1479
    %v1485 = vadd.f32 %v1484, %v1480
    %v1486 = vadd.f32 %v1485, %v1481
    %v1487 = vadd.f32 %v1486, %v1482
    %v1488 = vsel %vm1469, %v1483, 0.0
    %v1489 = vadd.f32 %v1487, %v1488
    %v1490 = vrot.slane %v1489, 4
    %v1491 = vadd.f32 %v1489, %v1490
    %v1492 = vrot.slane %v1491, 2
    %v1493 = vadd.f32 %v1491, %v1492
    %v1494 = vrot.slane %v1493, 1
    %v1495 = vadd.f32 %v1493, %v1494
    %v1496 = vmul.f32 %v1477, 0.03125
    %v1497 = vmul.f32 %v1495, 0.03125
    %v1498 = vmul.f32 %v1496, %v1496
    %v1499 = vsub.f32 %v1497, %v1498
    %v1500 = vmax.f32 %v1499, 0.0
    %v1501 = vadd.f32 %v1500, 1e-05
    %v1502 = vrsqrt.pop %v1501
    %v1503 = vmul.f32 %v1502, %v1501
    %v1504 = vmul.f32 %v1503, %v1502
    %v1505 = vmul.f32 0.5, %v1504
    %v1506 = vsub.f32 1.5, %v1505
    %v1507 = vmul.f32 %v1502, %v1506
    %vm1508 = vweird.f32 %v1501
    %vm1509 = vweird.f32 %v1502
    %vm1510 = vmor %vm1508, %vm1509
    %v1511 = vsel %vm1510, %v1502, %v1507
    %v1512 = vmul.f32 %v1457, %v1511
    %v1513 = vmul.f32 %v1496, %v1512
    %v1514 = vsub.f32 %v1458, %v1513
    %v1516 = vperm.slane %v1512, 0
    %v1518 = vmul.f32 %v1443, %v1516
    %v1519 = vmul.f32 %v1445, %v1516
    %v1520 = vmul.f32 %v1450, %v1516
    %v1521 = vmul.f32 %v1453, %v1516
    %v1523 = vperm.slane %v1514, 0
    %v1525 = vadd.f32 %v1518, %v1523
    %v1526 = vadd.f32 %v1519, %v1523
    %v1527 = vadd.f32 %v1520, %v1523
    %v1528 = vadd.f32 %v1521, %v1523
    %v1529 = vmax.f32 %v1525, 0.0
    %v1530 = vmax.f32 %v1526, 0.0
    %v1531 = vmax.f32 %v1527, 0.0
    %v1532 = vmax.f32 %v1528, 0.0
    %v1533 = vmax.f32 %v1529, %v1530
    %v1534 = vrot.slane %v1533, 4
    %v1535 = vmax.f32 %v1533, %v1534
    %v1536 = vrot.slane %v1535, 2
    %v1537 = vmax.f32 %v1535, %v1536
    %v1538 = vrot.slane %v1537, 1
    %v1539 = vmax.f32 %v1537, %v1538
    %v1540 = vmax.f32 %v1531, %v1532
    %v1541 = vrot.slane %v1540, 4
    %v1542 = vmax.f32 %v1540, %v1541
    %v1543 = vrot.slane %v1542, 2
    %v1544 = vmax.f32 %v1542, %v1543
    %v1545 = vrot.slane %v1544, 1
    %v1546 = vmax.f32 %v1544, %v1545
    %vm1547 = vcmask 1040384
    %v1548 = vsel %vm1547, %v1539, %v1546
    %v1549 = vld [vmem:[%s11] sm:$0xff]
    %v1550 = vld [vmem:[%s11 + $0x8] sm:$0xff]
    %v1551 = vld [vmem:[%s11 + $0x10] sm:$0xff]
    %v1552 = vld [vmem:[%s11 + $0x18] sm:$0xff]
    %v1553 = vld [vmem:[%s11 + $0x20] sm:$0xff]
    %v1554 = vld [vmem:[%s11 + $0x28] sm:$0xff]
    %v1555 = vld [vmem:[%s11 + $0x30] sm:$0xff]
    %v1556 = vld [vmem:[%s11 + $0x38] sm:$0xff]
    %v1557 = vld [vmem:[%s11 + $0x40] sm:$0xff]
    %v1558 = vld [vmem:[%s11 + $0x48] sm:$0xff]
    %v1559 = vld [vmem:[%s11 + $0x50] sm:$0xff]
    %v1560 = vld [vmem:[%s11 + $0x58] sm:$0xff]
    %v1561 = vld [vmem:[%s11 + $0x60] sm:$0xff]
    %v1562 = vld [vmem:[%s11 + $0x68] sm:$0xff]
    %v1563 = vld [vmem:[%s11 + $0x70] sm:$0xff]
    %v1564 = vld [vmem:[%s11 + $0x78] sm:$0xff]
    %v1565 = vld [vmem:[%s12] sm:$0x1]
    %v1567 = vperm.slane %v1565, 0
    %1569 = vmatpush.msra.mxu0 %v1564
    %1570 = vmatpush.msra.mxu0 %v1563
    %1571 = vmatpush.msra.mxu0 %v1562
    %1572 = vmatpush.msra.mxu0 %v1561
    %1573 = vmatpush.msra.mxu0 %v1560
    %1574 = vmatpush.msra.mxu0 %v1559
    %1575 = vmatpush.msra.mxu0 %v1558
    %1576 = vmatpush.msra.mxu0 %v1557
    %1577 = vmatpush.msra.mxu0 %v1556
    %1578 = vmatpush.msra.mxu0 %v1555
    %1579 = vmatpush.msra.mxu0 %v1554
    %1580 = vmatpush.msra.mxu0 %v1553
    %1581 = vmatpush.msra.mxu0 %v1552
    %1582 = vmatpush.msra.mxu0 %v1551
    %1583 = vmatpush.msra.mxu0 %v1550
    %1584 = vmatpush.msra.mxu0 %v1549
    %1585 = vmatmul.f32.gmra.mxu0 %v1548
    %v1586 = vpop.f32.mrf.mxu0
    %v1587 = vadd.f32 %v1567, %v1586
    %1588 = vdwg.mxu0
    %vm1589 = vcmask 1041408
    %v1590 = vsel %vm1589, %v1587, 0.0
    %v1591 = vrot.slane %v1590, 4
    %v1592 = vadd.f32 %v1590, %v1591
    %v1593 = vrot.slane %v1592, 2
    %v1594 = vadd.f32 %v1592, %v1593
    %v1595 = vrot.slane %v1594, 1
    %v1596 = vadd.f32 %v1594, %v1595
    %v1597 = vrcp.pop 2.0
    %v1598 = vmul.f32 2.0, %v1597
    %v1599 = vsub.f32 1.0, %v1598
    %v1600 = vmul.f32 %v1597, %v1599
    %v1601 = vadd.f32 %v1597, %v1600
    %vm1602 = vweird.f32 %v1597
    %v1603 = vsel %vm1602, %v1597, %v1601
    %v1604 = vmul.f32 %v1596, %v1603
    %v1605 = vsub.f32 %v1587, %v1604
    %v1606 = vmul.f32 %v1605, %v1605
    %v1607 = vsel %vm1589, %v1606, 0.0
    %v1608 = vrot.slane %v1607, 4
    %v1609 = vadd.f32 %v1607, %v1608
    %v1610 = vrot.slane %v1609, 2
    %v1611 = vadd.f32 %v1609, %v1610
    %v1612 = vrot.slane %v1611, 1
    %v1613 = vadd.f32 %v1611, %v1612
    %v1614 = vmul.f32 %v1613, %v1603
    %v1615 = vadd.f32 %v1614, 1e-05
    %v1616 = vrsqrt.pop %v1615
    %v1617 = vmul.f32 %v1616, %v1615
    %v1618 = vmul.f32 %v1617, %v1616
    %v1619 = vmul.f32 0.5, %v1618
    %v1620 = vsub.f32 1.5, %v1619
    %v1621 = vmul.f32 %v1616, %v1620
    %vm1622 = vweird.f32 %v1615
    %vm1623 = vweird.f32 %v1616
    %vm1624 = vmor %vm1622, %vm1623
    %v1625 = vsel %vm1624, %v1616, %v1621
    %v1626 = vmul.f32 %v1605, %v1625
    %v1627 = vld [vmem:[%s13] sm:$0x1]
    %v1629 = vperm.slane %v1627, 0
    %v1631 = vmul.f32 %v1626, %v1629
    %v1632 = vld [vmem:[%s14] sm:$0x1]
    %v1634 = vperm.slane %v1632, 0
    %v1636 = vadd.f32 %v1631, %v1634
    %1637 = vst [vmem:[#allocation2] sm:$0x3] %v1636
    // Predicated region
    $region62: #{tcr_extractor_forward.1} parent=1 // pred_check
      _
    $region63: #{tcr_extractor_forward.1} parent=1 // pred_check_branch
      %1639 = sbr.rel (0) target = $region65
    $region64: #{tcr_extractor_forward.1} parent=1 // pred_region
      %1641 = vsyncadd [#allocation3], 0
      %s1643 = sshll.u32 [#allocation2], 4
      %s1644 = int_to_ptr.vmem [resolvable:$true] %s1643
      %s1645 = sshll.u32 %s15, 4
      %s1646 = int_to_ptr.hbm [resolvable:$true] %s1645
      %1648 = dma.vmem_to_hbm [thread:$0]  %s1644, 32, %s1646, [#allocation3]
    $region65: #{tcr_extractor_forward.1} parent=1 // pred_fallthru
      _
    // Predicated region
    $region66: #{tcr_extractor_forward.1} parent=1 // pred_check
      _
    $region67: #{tcr_extractor_forward.1} parent=1 // pred_check_branch
      %1650 = sbr.rel (0) target = $region69
    $region68: #{tcr_extractor_forward.1} parent=1 // pred_region
      %1652 = dma.done [#allocation3], 32
    $region69: #{tcr_extractor_forward.1} parent=1 // pred_fallthru
      _
    %1653 = vsyncpa [#allocation3], 1

</llo_original>
